<compile_context>
chip_gen: v5e
topology: v5e:2x2
jax: 0.10.0
libtpu: 0.0.40
codegen_flags: <defaults>
</compile_context>

<pallas_src>
import jax
import jax.numpy as jnp
import numpy as np
from jax.experimental import pallas as pl
from jax.experimental.pallas import tpu as pltpu

# ---------------- small synthetic config ----------------
B = 2              # batch
C = 3              # image channels
IMG = 16           # image size
P = 8              # patch size
SEQ = (IMG // P) ** 2          # num patches == seq len == 4
D = 64             # hidden size
HEADS = 4
HD = D // HEADS                # head dim 16
FF = 128           # MLP intermediate size
LAYERS = 2         # encoder layers
EPS = 1e-6
PATCH_DIM = C * P * P          # 192
SCALE = HD ** -0.5


def _layernorm(x, g, b):
    mu = jnp.mean(x, axis=-1, keepdims=True)
    var = jnp.mean((x - mu) ** 2, axis=-1, keepdims=True)
    return (x - mu) * jax.lax.rsqrt(var + EPS) * g + b


# ---------------- fused Pallas kernel (whole forward, one batch element) ----
def siglip_fused_kernel(patch_ref, pe_w_ref, emb_ref,
                        ln1_g_ref, ln1_b_ref, wqkv_ref, bqkv_ref, wo_ref, bo_ref,
                        ln2_g_ref, ln2_b_ref, w1_ref, b1_ref, w2_ref, b2_ref,
                        post_g_ref, post_b_ref, out_ref):
    bf16 = jnp.bfloat16
    f32 = jnp.float32

    # ---- patch embedding + (bias + position embedding) folded table ----
    patches = patch_ref[0]                                   # (SEQ, PATCH_DIM) bf16
    x = jnp.dot(patches, pe_w_ref[...], preferred_element_type=f32)
    x = x + emb_ref[...]                                     # (SEQ, D) f32

    # ---- encoder layers (statically unrolled; weights resident in VMEM) ----
    for l in range(LAYERS):
        # --- self-attention block ---
        h = _layernorm(x, ln1_g_ref[l], ln1_b_ref[l])        # f32
        qkv = jnp.dot(h.astype(bf16), wqkv_ref[l],
                      preferred_element_type=f32) + bqkv_ref[l]   # (SEQ, 3D) f32
        wo_l = wo_ref[l]                                     # (D, D) bf16

        # accumulate output projection per head; init with output-proj bias
        attn = jnp.broadcast_to(bo_ref[l], (SEQ, D)).astype(f32)
        for hi in range(HEADS):
            q = qkv[:, hi * HD:(hi + 1) * HD] * SCALE
            k = qkv[:, D + hi * HD: D + (hi + 1) * HD]
            v = qkv[:, 2 * D + hi * HD: 2 * D + (hi + 1) * HD]
            # scores: contract head dim of q and k (no explicit transpose)
            s = jax.lax.dot_general(q.astype(bf16), k.astype(bf16),
                                    (((1,), (1,)), ((), ())),
                                    preferred_element_type=f32)   # (SEQ, SEQ)
            s = s - jnp.max(s, axis=-1, keepdims=True)
            e = jnp.exp(s)
            p = e * pl.reciprocal(jnp.sum(e, axis=-1, keepdims=True), approx=True)
            av = jnp.dot(p.astype(bf16), v.astype(bf16),
                         preferred_element_type=f32)              # (SEQ, HD)
            attn = attn + jnp.dot(av.astype(bf16),
                                  wo_l[hi * HD:(hi + 1) * HD, :],
                                  preferred_element_type=f32)
        x = x + attn                                         # residual 1 (f32)

        # --- MLP block ---
        h2 = _layernorm(x, ln2_g_ref[l], ln2_b_ref[l])
        f = jnp.dot(h2.astype(bf16), w1_ref[l],
                    preferred_element_type=f32) + b1_ref[l]  # (SEQ, FF) f32
        f = jax.nn.gelu(f, approximate=True)                 # gelu_pytorch_tanh, f32
        f = jnp.dot(f.astype(bf16), w2_ref[l],
                    preferred_element_type=f32) + b2_ref[l]
        x = x + f                                            # residual 2 (f32)

    # ---- post layernorm ----
    out_ref[0] = _layernorm(x, post_g_ref[...], post_b_ref[...])


# ---------------- pallas_call wrapper ----------------
def _const_spec(arr):
    nd = arr.ndim
    return pl.BlockSpec(arr.shape, lambda i, _nd=nd: (0,) * _nd)


def siglip_vision_transformer(pixel_values, params):
    """Full forward: embeddings -> encoder -> post layernorm (one fused kernel)."""
    (pe_w, pe_b, pos_emb, layer_params, post_g, post_b) = params

    # glue: NCHW image -> per-patch rows with (c, ph, pw) ordering
    patches = pixel_values.reshape(B, C, IMG // P, P, IMG // P, P)
    patches = patches.transpose(0, 2, 4, 1, 3, 5).reshape(B, SEQ, PATCH_DIM)

    # stack per-layer weights on a leading layer axis; fuse Q/K/V
    def stack(idx):
        return jnp.stack([lp[idx] for lp in layer_params])

    ln1_g, ln1_b = stack(0), stack(1)
    wq, bq, wk, bk, wv, bv = (stack(i) for i in range(2, 8))
    wo, bo = stack(8), stack(9)
    ln2_g, ln2_b = stack(10), stack(11)
    w1, b1, w2, b2 = stack(12), stack(13), stack(14), stack(15)
    wqkv = jnp.concatenate([wq, wk, wv], axis=-1)            # (L, D, 3D)
    bqkv = jnp.concatenate([bq, bk, bv], axis=-1)            # (L, 1, 3D)
    emb_add = pe_b + pos_emb                                 # (SEQ, D) f32

    bf = jnp.bfloat16
    args = (patches.astype(bf),
            pe_w.astype(bf), emb_add,
            ln1_g, ln1_b, wqkv.astype(bf), bqkv, wo.astype(bf), bo,
            ln2_g, ln2_b, w1.astype(bf), b1, w2.astype(bf), b2,
            post_g, post_b)

    in_specs = [pl.BlockSpec((1, SEQ, PATCH_DIM), lambda i: (i, 0, 0))]
    in_specs += [_const_spec(a) for a in args[1:]]

    return pl.pallas_call(
        siglip_fused_kernel,
        out_shape=jax.ShapeDtypeStruct((B, SEQ, D), jnp.float32),
        grid=(B,),
        in_specs=in_specs,
        out_specs=pl.BlockSpec((1, SEQ, D), lambda i: (i, 0, 0)),
        compiler_params=pltpu.CompilerParams(
            dimension_semantics=("parallel",)),
    )(*args)


# ---------------- pure-JAX reference (same mixed-precision math) ----------------
def ref_forward(pixel_values, params):
    """Mirrors the kernel's numerics: bf16 matmul operands, f32 accumulation,
    f32 LayerNorm/softmax/GELU/residuals."""
    bf = jnp.bfloat16
    f32 = jnp.float32

    def bmm(a, w):  # (B,S,d) @ (d,e) with bf16 operands, f32 accum
        return jnp.einsum('bsd,de->bse', a.astype(bf), w.astype(bf),
                          preferred_element_type=f32)

    (pe_w, pe_b, pos_emb, layer_params, post_g, post_b) = params
    patches = pixel_values.reshape(B, C, IMG // P, P, IMG // P, P)
    patches = patches.transpose(0, 2, 4, 1, 3, 5).reshape(B, SEQ, PATCH_DIM)

    x = jnp.einsum('bsp,pd->bsd', patches.astype(bf), pe_w.astype(bf),
                   preferred_element_type=f32) + (pe_b + pos_emb)
    for lp in layer_params:
        (ln1_g, ln1_b, wq, bq, wk, bk, wv, bv, wo, bo,
         ln2_g, ln2_b, w1, b1, w2, b2) = lp
        h = _layernorm(x, ln1_g, ln1_b)
        q = ((bmm(h, wq) + bq) * SCALE).reshape(B, SEQ, HEADS, HD)
        k = (bmm(h, wk) + bk).reshape(B, SEQ, HEADS, HD)
        v = (bmm(h, wv) + bv).reshape(B, SEQ, HEADS, HD)
        s = jnp.einsum('bqhd,bkhd->bhqk', q.astype(bf), k.astype(bf),
                       preferred_element_type=f32)
        p = jax.nn.softmax(s, axis=-1)
        a = jnp.einsum('bhqk,bkhd->bqhd', p.astype(bf), v.astype(bf),
                       preferred_element_type=f32).reshape(B, SEQ, D)
        x = x + bmm(a, wo) + bo
        h2 = _layernorm(x, ln2_g, ln2_b)
        f = jax.nn.gelu(bmm(h2, w1) + b1, approximate=True)
        x = x + bmm(f, w2) + b2
    return _layernorm(x, post_g, post_b)


# ---------------- deterministic parameter construction ----------------
def make_params(key):
    n_keys = 3 + LAYERS * 16 + 2          # exact number of nrm() calls below
    keys = jax.random.split(key, n_keys)
    ki = iter(range(n_keys))

    def nrm(shape, scale=0.02):
        return (scale * jax.random.normal(keys[next(ki)], shape)).astype(jnp.float32)

    pe_w = nrm((PATCH_DIM, D))            # conv weight flattened: (C*P*P, D)
    pe_b = nrm((1, D))
    pos_emb = nrm((SEQ, D))               # nn.Embedding(num_positions, D) table

    layer_params = []
    for _ in range(LAYERS):
        ln1_g = 1.0 + nrm((1, D)); ln1_b = nrm((1, D))
        wq = nrm((D, D)); bq = nrm((1, D))
        wk = nrm((D, D)); bk = nrm((1, D))
        wv = nrm((D, D)); bv = nrm((1, D))
        wo = nrm((D, D)); bo = nrm((1, D))
        ln2_g = 1.0 + nrm((1, D)); ln2_b = nrm((1, D))
        w1 = nrm((D, FF)); b1 = nrm((1, FF))
        w2 = nrm((FF, D)); b2 = nrm((1, D))
        layer_params.append((ln1_g, ln1_b, wq, bq, wk, bk, wv, bv, wo, bo,
                             ln2_g, ln2_b, w1, b1, w2, b2))

    post_g = 1.0 + nrm((1, D))
    post_b = nrm((1, D))
    return (pe_w, pe_b, pos_emb, tuple(layer_params), post_g, post_b)


if __name__ == "__main__":
    key = jax.random.PRNGKey(0)
    k_pix, k_par = jax.random.split(key)
    pixel_values = jax.random.normal(k_pix, (B, C, IMG, IMG), dtype=jnp.float32)
    params = make_params(k_par)

    fwd = jax.jit(siglip_vision_transformer)
    out = jax.block_until_ready(fwd(pixel_values, params))

    ref = jax.block_until_ready(ref_forward(pixel_values, params))
    np.testing.assert_allclose(np.asarray(out), np.asarray(ref),
                               rtol=2e-3, atol=2e-3)
    assert out.shape == (B, SEQ, D) and out.dtype == jnp.float32
    print("KERNEL_OK")
</pallas_src>

<mosaic_0001>
module attributes {stable_mosaic.version = 11 : i64} {
  func.func @siglip_fused_kernel(%arg0: i32, %arg1: memref<1x4x192xbf16, #tpu.memory_space<vmem>>, %arg2: memref<192x64xbf16, #tpu.memory_space<vmem>>, %arg3: memref<4x64xf32, #tpu.memory_space<vmem>>, %arg4: memref<2x1x64xf32, #tpu.memory_space<vmem>>, %arg5: memref<2x1x64xf32, #tpu.memory_space<vmem>>, %arg6: memref<2x64x192xbf16, #tpu.memory_space<vmem>>, %arg7: memref<2x1x192xf32, #tpu.memory_space<vmem>>, %arg8: memref<2x64x64xbf16, #tpu.memory_space<vmem>>, %arg9: memref<2x1x64xf32, #tpu.memory_space<vmem>>, %arg10: memref<2x1x64xf32, #tpu.memory_space<vmem>>, %arg11: memref<2x1x64xf32, #tpu.memory_space<vmem>>, %arg12: memref<2x64x128xbf16, #tpu.memory_space<vmem>>, %arg13: memref<2x1x128xf32, #tpu.memory_space<vmem>>, %arg14: memref<2x128x64xbf16, #tpu.memory_space<vmem>>, %arg15: memref<2x1x64xf32, #tpu.memory_space<vmem>>, %arg16: memref<1x64xf32, #tpu.memory_space<vmem>>, %arg17: memref<1x64xf32, #tpu.memory_space<vmem>>, %arg18: memref<1x4x64xf32, #tpu.memory_space<vmem>>) attributes {dimension_semantics = [#tpu.dimension_semantics<parallel>], iteration_bounds = array<i64: 2>, scalar_prefetch = 0 : i64, scratch_operands = 0 : i64, tpu.core_type = #tpu.core_type<tc>, window_params = [{transform_indices = @transform_0, window_bounds = array<i64: 1, 4, 192>}, {pipeline_mode = #tpu.pipeline_mode<synchronous>, transform_indices = @transform_1, window_bounds = array<i64: 192, 64>}, {pipeline_mode = #tpu.pipeline_mode<synchronous>, transform_indices = @transform_2, window_bounds = array<i64: 4, 64>}, {pipeline_mode = #tpu.pipeline_mode<synchronous>, transform_indices = @transform_3, window_bounds = array<i64: 2, 1, 64>}, {pipeline_mode = #tpu.pipeline_mode<synchronous>, transform_indices = @transform_4, window_bounds = array<i64: 2, 1, 64>}, {pipeline_mode = #tpu.pipeline_mode<synchronous>, transform_indices = @transform_5, window_bounds = array<i64: 2, 64, 192>}, {pipeline_mode = #tpu.pipeline_mode<synchronous>, transform_indices = @transform_6, window_bounds = array<i64: 2, 1, 192>}, {pipeline_mode = #tpu.pipeline_mode<synchronous>, transform_indices = @transform_7, window_bounds = array<i64: 2, 64, 64>}, {pipeline_mode = #tpu.pipeline_mode<synchronous>, transform_indices = @transform_8, window_bounds = array<i64: 2, 1, 64>}, {pipeline_mode = #tpu.pipeline_mode<synchronous>, transform_indices = @transform_9, window_bounds = array<i64: 2, 1, 64>}, {pipeline_mode = #tpu.pipeline_mode<synchronous>, transform_indices = @transform_10, window_bounds = array<i64: 2, 1, 64>}, {pipeline_mode = #tpu.pipeline_mode<synchronous>, transform_indices = @transform_11, window_bounds = array<i64: 2, 64, 128>}, {pipeline_mode = #tpu.pipeline_mode<synchronous>, transform_indices = @transform_12, window_bounds = array<i64: 2, 1, 128>}, {pipeline_mode = #tpu.pipeline_mode<synchronous>, transform_indices = @transform_13, window_bounds = array<i64: 2, 128, 64>}, {pipeline_mode = #tpu.pipeline_mode<synchronous>, transform_indices = @transform_14, window_bounds = array<i64: 2, 1, 64>}, {pipeline_mode = #tpu.pipeline_mode<synchronous>, transform_indices = @transform_15, window_bounds = array<i64: 1, 64>}, {pipeline_mode = #tpu.pipeline_mode<synchronous>, transform_indices = @transform_16, window_bounds = array<i64: 1, 64>}, {transform_indices = @transform_17, window_bounds = array<i64: 1, 4, 64>}]} {
    %c0 = arith.constant 0 : index
    %c0_0 = arith.constant 0 : index
    %c0_1 = arith.constant 0 : index
    %0 = vector.load %arg1[%c0, %c0_0, %c0_1] : memref<1x4x192xbf16, #tpu.memory_space<vmem>>, vector<1x4x192xbf16>
    %1 = vector.shape_cast %0 : vector<1x4x192xbf16> to vector<4x192xbf16>
    %c0_2 = arith.constant 0 : index
    %c0_3 = arith.constant 0 : index
    %2 = vector.load %arg2[%c0_2, %c0_3] : memref<192x64xbf16, #tpu.memory_space<vmem>>, vector<192x64xbf16>
    %cst = arith.constant dense<0.000000e+00> : vector<4x64xf32>
    %3 = tpu.matmul %1, %2, %cst {dimension_numbers = #tpu.dot_dimension_numbers<[1], [0], [0], [1], [0, 0, 1, 1], [], []>} : vector<4x192xbf16>, vector<192x64xbf16>, vector<4x64xf32> -> vector<4x64xf32>
    %c0_4 = arith.constant 0 : index
    %c0_5 = arith.constant 0 : index
    %4 = vector.load %arg3[%c0_4, %c0_5] : memref<4x64xf32, #tpu.memory_space<vmem>>, vector<4x64xf32>
    %5 = arith.addf %3, %4 : vector<4x64xf32>
    %c0_6 = arith.constant 0 : index
    %c0_7 = arith.constant 0 : index
    %c0_8 = arith.constant 0 : index
    %6 = vector.load %arg4[%c0_6, %c0_7, %c0_8] : memref<2x1x64xf32, #tpu.memory_space<vmem>>, vector<1x1x64xf32>
    %7 = vector.shape_cast %6 : vector<1x1x64xf32> to vector<1x64xf32>
    %c0_9 = arith.constant 0 : index
    %c0_10 = arith.constant 0 : index
    %c0_11 = arith.constant 0 : index
    %8 = vector.load %arg5[%c0_9, %c0_10, %c0_11] : memref<2x1x64xf32, #tpu.memory_space<vmem>>, vector<1x1x64xf32>
    %9 = vector.shape_cast %8 : vector<1x1x64xf32> to vector<1x64xf32>
    %cst_12 = arith.constant dense<0.000000e+00> : vector<4xf32>
    %10 = vector.multi_reduction <add>, %5, %cst_12 [1] : vector<4x64xf32> to vector<4xf32>
    %11 = vector.shape_cast %10 : vector<4xf32> to vector<4x1xf32>
    %cst_13 = arith.constant 6.400000e+01 : f32
    %12 = vector.broadcast %cst_13 : f32 to vector<4x1xf32>
    %13 = arith.divf %11, %12 : vector<4x1xf32>
    %14 = vector.broadcast %13 : vector<4x1xf32> to vector<4x64xf32>
    %15 = arith.subf %5, %14 : vector<4x64xf32>
    %16 = arith.mulf %15, %15 : vector<4x64xf32>
    %cst_14 = arith.constant dense<0.000000e+00> : vector<4xf32>
    %17 = vector.multi_reduction <add>, %16, %cst_14 [1] : vector<4x64xf32> to vector<4xf32>
    %18 = vector.shape_cast %17 : vector<4xf32> to vector<4x1xf32>
    %cst_15 = arith.constant 6.400000e+01 : f32
    %19 = vector.broadcast %cst_15 : f32 to vector<4x1xf32>
    %20 = arith.divf %18, %19 : vector<4x1xf32>
    %21 = vector.broadcast %13 : vector<4x1xf32> to vector<4x64xf32>
    %22 = arith.subf %5, %21 : vector<4x64xf32>
    %cst_16 = arith.constant 9.99999997E-7 : f32
    %23 = vector.broadcast %cst_16 : f32 to vector<4x1xf32>
    %24 = arith.addf %20, %23 : vector<4x1xf32>
    %25 = math.rsqrt %24 : vector<4x1xf32>
    %26 = vector.broadcast %25 : vector<4x1xf32> to vector<4x64xf32>
    %27 = arith.mulf %22, %26 : vector<4x64xf32>
    %28 = vector.broadcast %7 : vector<1x64xf32> to vector<4x64xf32>
    %29 = arith.mulf %27, %28 : vector<4x64xf32>
    %30 = vector.broadcast %9 : vector<1x64xf32> to vector<4x64xf32>
    %31 = arith.addf %29, %30 : vector<4x64xf32>
    %32 = arith.truncf %31 : vector<4x64xf32> to vector<4x64xbf16>
    %c0_17 = arith.constant 0 : index
    %c0_18 = arith.constant 0 : index
    %c0_19 = arith.constant 0 : index
    %33 = vector.load %arg6[%c0_17, %c0_18, %c0_19] : memref<2x64x192xbf16, #tpu.memory_space<vmem>>, vector<1x64x192xbf16>
    %34 = vector.shape_cast %33 : vector<1x64x192xbf16> to vector<64x192xbf16>
    %cst_20 = arith.constant dense<0.000000e+00> : vector<4x192xf32>
    %35 = tpu.matmul %32, %34, %cst_20 {dimension_numbers = #tpu.dot_dimension_numbers<[1], [0], [0], [1], [0, 0, 1, 1], [], []>} : vector<4x64xbf16>, vector<64x192xbf16>, vector<4x192xf32> -> vector<4x192xf32>
    %c0_21 = arith.constant 0 : index
    %c0_22 = arith.constant 0 : index
    %c0_23 = arith.constant 0 : index
    %36 = vector.load %arg7[%c0_21, %c0_22, %c0_23] : memref<2x1x192xf32, #tpu.memory_space<vmem>>, vector<1x1x192xf32>
    %37 = vector.shape_cast %36 : vector<1x1x192xf32> to vector<1x192xf32>
    %38 = vector.broadcast %37 : vector<1x192xf32> to vector<4x192xf32>
    %39 = arith.addf %35, %38 : vector<4x192xf32>
    %c0_24 = arith.constant 0 : index
    %c0_25 = arith.constant 0 : index
    %c0_26 = arith.constant 0 : index
    %40 = vector.load %arg8[%c0_24, %c0_25, %c0_26] : memref<2x64x64xbf16, #tpu.memory_space<vmem>>, vector<1x64x64xbf16>
    %41 = vector.shape_cast %40 : vector<1x64x64xbf16> to vector<64x64xbf16>
    %c0_27 = arith.constant 0 : index
    %c0_28 = arith.constant 0 : index
    %c0_29 = arith.constant 0 : index
    %42 = vector.load %arg9[%c0_27, %c0_28, %c0_29] : memref<2x1x64xf32, #tpu.memory_space<vmem>>, vector<1x1x64xf32>
    %43 = vector.shape_cast %42 : vector<1x1x64xf32> to vector<1x64xf32>
    %44 = vector.shape_cast %43 : vector<1x64xf32> to vector<1x64xf32>
    %45 = vector.broadcast %44 : vector<1x64xf32> to vector<4x64xf32>
    %46 = vector.extract_strided_slice %39 {offsets = [0, 0], sizes = [4, 16], strides = [1, 1]} : vector<4x192xf32> to vector<4x16xf32>
    %cst_30 = arith.constant 2.500000e-01 : f32
    %47 = vector.broadcast %cst_30 : f32 to vector<4x16xf32>
    %48 = arith.mulf %46, %47 : vector<4x16xf32>
    %49 = vector.extract_strided_slice %39 {offsets = [0, 64], sizes = [4, 16], strides = [1, 1]} : vector<4x192xf32> to vector<4x16xf32>
    %50 = vector.extract_strided_slice %39 {offsets = [0, 128], sizes = [4, 16], strides = [1, 1]} : vector<4x192xf32> to vector<4x16xf32>
    %51 = arith.truncf %48 : vector<4x16xf32> to vector<4x16xbf16>
    %52 = arith.truncf %49 : vector<4x16xf32> to vector<4x16xbf16>
    %cst_31 = arith.constant dense<0.000000e+00> : vector<4x4xf32>
    %53 = tpu.matmul %51, %52, %cst_31 {dimension_numbers = #tpu.dot_dimension_numbers<[1], [1], [0], [0], [0, 0, 1, 0], [], []>} : vector<4x16xbf16>, vector<4x16xbf16>, vector<4x4xf32> -> vector<4x4xf32>
    %cst_32 = arith.constant dense<0xFF800000> : vector<4xf32>
    %54 = vector.multi_reduction <maximumf>, %53, %cst_32 [1] : vector<4x4xf32> to vector<4xf32>
    %55 = vector.shape_cast %54 : vector<4xf32> to vector<4x1xf32>
    %56 = vector.broadcast %55 : vector<4x1xf32> to vector<4x4xf32>
    %57 = arith.subf %53, %56 : vector<4x4xf32>
    %58 = math.exp %57 : vector<4x4xf32>
    %cst_33 = arith.constant dense<0.000000e+00> : vector<4xf32>
    %59 = vector.multi_reduction <add>, %58, %cst_33 [1] : vector<4x4xf32> to vector<4xf32>
    %60 = vector.shape_cast %59 : vector<4xf32> to vector<4x1xf32>
    %61 = tpu.reciprocal %60 {approx = true} : vector<4x1xf32> -> vector<4x1xf32>
    %62 = vector.broadcast %61 : vector<4x1xf32> to vector<4x4xf32>
    %63 = arith.mulf %58, %62 : vector<4x4xf32>
    %64 = arith.truncf %63 : vector<4x4xf32> to vector<4x4xbf16>
    %65 = arith.truncf %50 : vector<4x16xf32> to vector<4x16xbf16>
    %cst_34 = arith.constant dense<0.000000e+00> : vector<4x16xf32>
    %66 = tpu.matmul %64, %65, %cst_34 {dimension_numbers = #tpu.dot_dimension_numbers<[1], [0], [0], [1], [0, 0, 1, 1], [], []>} : vector<4x4xbf16>, vector<4x16xbf16>, vector<4x16xf32> -> vector<4x16xf32>
    %67 = arith.truncf %66 : vector<4x16xf32> to vector<4x16xbf16>
    %68 = vector.extract_strided_slice %41 {offsets = [0, 0], sizes = [16, 64], strides = [1, 1]} : vector<64x64xbf16> to vector<16x64xbf16>
    %cst_35 = arith.constant dense<0.000000e+00> : vector<4x64xf32>
    %69 = tpu.matmul %67, %68, %cst_35 {dimension_numbers = #tpu.dot_dimension_numbers<[1], [0], [0], [1], [0, 0, 1, 1], [], []>} : vector<4x16xbf16>, vector<16x64xbf16>, vector<4x64xf32> -> vector<4x64xf32>
    %70 = arith.addf %45, %69 : vector<4x64xf32>
    %71 = vector.extract_strided_slice %39 {offsets = [0, 16], sizes = [4, 16], strides = [1, 1]} : vector<4x192xf32> to vector<4x16xf32>
    %cst_36 = arith.constant 2.500000e-01 : f32
    %72 = vector.broadcast %cst_36 : f32 to vector<4x16xf32>
    %73 = arith.mulf %71, %72 : vector<4x16xf32>
    %74 = vector.extract_strided_slice %39 {offsets = [0, 80], sizes = [4, 16], strides = [1, 1]} : vector<4x192xf32> to vector<4x16xf32>
    %75 = vector.extract_strided_slice %39 {offsets = [0, 144], sizes = [4, 16], strides = [1, 1]} : vector<4x192xf32> to vector<4x16xf32>
    %76 = arith.truncf %73 : vector<4x16xf32> to vector<4x16xbf16>
    %77 = arith.truncf %74 : vector<4x16xf32> to vector<4x16xbf16>
    %cst_37 = arith.constant dense<0.000000e+00> : vector<4x4xf32>
    %78 = tpu.matmul %76, %77, %cst_37 {dimension_numbers = #tpu.dot_dimension_numbers<[1], [1], [0], [0], [0, 0, 1, 0], [], []>} : vector<4x16xbf16>, vector<4x16xbf16>, vector<4x4xf32> -> vector<4x4xf32>
    %cst_38 = arith.constant dense<0xFF800000> : vector<4xf32>
    %79 = vector.multi_reduction <maximumf>, %78, %cst_38 [1] : vector<4x4xf32> to vector<4xf32>
    %80 = vector.shape_cast %79 : vector<4xf32> to vector<4x1xf32>
    %81 = vector.broadcast %80 : vector<4x1xf32> to vector<4x4xf32>
    %82 = arith.subf %78, %81 : vector<4x4xf32>
    %83 = math.exp %82 : vector<4x4xf32>
    %cst_39 = arith.constant dense<0.000000e+00> : vector<4xf32>
    %84 = vector.multi_reduction <add>, %83, %cst_39 [1] : vector<4x4xf32> to vector<4xf32>
    %85 = vector.shape_cast %84 : vector<4xf32> to vector<4x1xf32>
    %86 = tpu.reciprocal %85 {approx = true} : vector<4x1xf32> -> vector<4x1xf32>
    %87 = vector.broadcast %86 : vector<4x1xf32> to vector<4x4xf32>
    %88 = arith.mulf %83, %87 : vector<4x4xf32>
    %89 = arith.truncf %88 : vector<4x4xf32> to vector<4x4xbf16>
    %90 = arith.truncf %75 : vector<4x16xf32> to vector<4x16xbf16>
    %cst_40 = arith.constant dense<0.000000e+00> : vector<4x16xf32>
    %91 = tpu.matmul %89, %90, %cst_40 {dimension_numbers = #tpu.dot_dimension_numbers<[1], [0], [0], [1], [0, 0, 1, 1], [], []>} : vector<4x4xbf16>, vector<4x16xbf16>, vector<4x16xf32> -> vector<4x16xf32>
    %92 = arith.truncf %91 : vector<4x16xf32> to vector<4x16xbf16>
    %93 = vector.extract_strided_slice %41 {offsets = [16, 0], sizes = [16, 64], strides = [1, 1]} : vector<64x64xbf16> to vector<16x64xbf16>
    %cst_41 = arith.constant dense<0.000000e+00> : vector<4x64xf32>
    %94 = tpu.matmul %92, %93, %cst_41 {dimension_numbers = #tpu.dot_dimension_numbers<[1], [0], [0], [1], [0, 0, 1, 1], [], []>} : vector<4x16xbf16>, vector<16x64xbf16>, vector<4x64xf32> -> vector<4x64xf32>
    %95 = arith.addf %70, %94 : vector<4x64xf32>
    %96 = vector.extract_strided_slice %39 {offsets = [0, 32], sizes = [4, 16], strides = [1, 1]} : vector<4x192xf32> to vector<4x16xf32>
    %cst_42 = arith.constant 2.500000e-01 : f32
    %97 = vector.broadcast %cst_42 : f32 to vector<4x16xf32>
    %98 = arith.mulf %96, %97 : vector<4x16xf32>
    %99 = vector.extract_strided_slice %39 {offsets = [0, 96], sizes = [4, 16], strides = [1, 1]} : vector<4x192xf32> to vector<4x16xf32>
    %100 = vector.extract_strided_slice %39 {offsets = [0, 160], sizes = [4, 16], strides = [1, 1]} : vector<4x192xf32> to vector<4x16xf32>
    %101 = arith.truncf %98 : vector<4x16xf32> to vector<4x16xbf16>
    %102 = arith.truncf %99 : vector<4x16xf32> to vector<4x16xbf16>
    %cst_43 = arith.constant dense<0.000000e+00> : vector<4x4xf32>
    %103 = tpu.matmul %101, %102, %cst_43 {dimension_numbers = #tpu.dot_dimension_numbers<[1], [1], [0], [0], [0, 0, 1, 0], [], []>} : vector<4x16xbf16>, vector<4x16xbf16>, vector<4x4xf32> -> vector<4x4xf32>
    %cst_44 = arith.constant dense<0xFF800000> : vector<4xf32>
    %104 = vector.multi_reduction <maximumf>, %103, %cst_44 [1] : vector<4x4xf32> to vector<4xf32>
    %105 = vector.shape_cast %104 : vector<4xf32> to vector<4x1xf32>
    %106 = vector.broadcast %105 : vector<4x1xf32> to vector<4x4xf32>
    %107 = arith.subf %103, %106 : vector<4x4xf32>
    %108 = math.exp %107 : vector<4x4xf32>
    %cst_45 = arith.constant dense<0.000000e+00> : vector<4xf32>
    %109 = vector.multi_reduction <add>, %108, %cst_45 [1] : vector<4x4xf32> to vector<4xf32>
    %110 = vector.shape_cast %109 : vector<4xf32> to vector<4x1xf32>
    %111 = tpu.reciprocal %110 {approx = true} : vector<4x1xf32> -> vector<4x1xf32>
    %112 = vector.broadcast %111 : vector<4x1xf32> to vector<4x4xf32>
    %113 = arith.mulf %108, %112 : vector<4x4xf32>
    %114 = arith.truncf %113 : vector<4x4xf32> to vector<4x4xbf16>
    %115 = arith.truncf %100 : vector<4x16xf32> to vector<4x16xbf16>
    %cst_46 = arith.constant dense<0.000000e+00> : vector<4x16xf32>
    %116 = tpu.matmul %114, %115, %cst_46 {dimension_numbers = #tpu.dot_dimension_numbers<[1], [0], [0], [1], [0, 0, 1, 1], [], []>} : vector<4x4xbf16>, vector<4x16xbf16>, vector<4x16xf32> -> vector<4x16xf32>
    %117 = arith.truncf %116 : vector<4x16xf32> to vector<4x16xbf16>
    %118 = vector.extract_strided_slice %41 {offsets = [32, 0], sizes = [16, 64], strides = [1, 1]} : vector<64x64xbf16> to vector<16x64xbf16>
    %cst_47 = arith.constant dense<0.000000e+00> : vector<4x64xf32>
    %119 = tpu.matmul %117, %118, %cst_47 {dimension_numbers = #tpu.dot_dimension_numbers<[1], [0], [0], [1], [0, 0, 1, 1], [], []>} : vector<4x16xbf16>, vector<16x64xbf16>, vector<4x64xf32> -> vector<4x64xf32>
    %120 = arith.addf %95, %119 : vector<4x64xf32>
    %121 = vector.extract_strided_slice %39 {offsets = [0, 48], sizes = [4, 16], strides = [1, 1]} : vector<4x192xf32> to vector<4x16xf32>
    %cst_48 = arith.constant 2.500000e-01 : f32
    %122 = vector.broadcast %cst_48 : f32 to vector<4x16xf32>
    %123 = arith.mulf %121, %122 : vector<4x16xf32>
    %124 = vector.extract_strided_slice %39 {offsets = [0, 112], sizes = [4, 16], strides = [1, 1]} : vector<4x192xf32> to vector<4x16xf32>
    %125 = vector.extract_strided_slice %39 {offsets = [0, 176], sizes = [4, 16], strides = [1, 1]} : vector<4x192xf32> to vector<4x16xf32>
    %126 = arith.truncf %123 : vector<4x16xf32> to vector<4x16xbf16>
    %127 = arith.truncf %124 : vector<4x16xf32> to vector<4x16xbf16>
    %cst_49 = arith.constant dense<0.000000e+00> : vector<4x4xf32>
    %128 = tpu.matmul %126, %127, %cst_49 {dimension_numbers = #tpu.dot_dimension_numbers<[1], [1], [0], [0], [0, 0, 1, 0], [], []>} : vector<4x16xbf16>, vector<4x16xbf16>, vector<4x4xf32> -> vector<4x4xf32>
    %cst_50 = arith.constant dense<0xFF800000> : vector<4xf32>
    %129 = vector.multi_reduction <maximumf>, %128, %cst_50 [1] : vector<4x4xf32> to vector<4xf32>
    %130 = vector.shape_cast %129 : vector<4xf32> to vector<4x1xf32>
    %131 = vector.broadcast %130 : vector<4x1xf32> to vector<4x4xf32>
    %132 = arith.subf %128, %131 : vector<4x4xf32>
    %133 = math.exp %132 : vector<4x4xf32>
    %cst_51 = arith.constant dense<0.000000e+00> : vector<4xf32>
    %134 = vector.multi_reduction <add>, %133, %cst_51 [1] : vector<4x4xf32> to vector<4xf32>
    %135 = vector.shape_cast %134 : vector<4xf32> to vector<4x1xf32>
    %136 = tpu.reciprocal %135 {approx = true} : vector<4x1xf32> -> vector<4x1xf32>
    %137 = vector.broadcast %136 : vector<4x1xf32> to vector<4x4xf32>
    %138 = arith.mulf %133, %137 : vector<4x4xf32>
    %139 = arith.truncf %138 : vector<4x4xf32> to vector<4x4xbf16>
    %140 = arith.truncf %125 : vector<4x16xf32> to vector<4x16xbf16>
    %cst_52 = arith.constant dense<0.000000e+00> : vector<4x16xf32>
    %141 = tpu.matmul %139, %140, %cst_52 {dimension_numbers = #tpu.dot_dimension_numbers<[1], [0], [0], [1], [0, 0, 1, 1], [], []>} : vector<4x4xbf16>, vector<4x16xbf16>, vector<4x16xf32> -> vector<4x16xf32>
    %142 = arith.truncf %141 : vector<4x16xf32> to vector<4x16xbf16>
    %143 = vector.extract_strided_slice %41 {offsets = [48, 0], sizes = [16, 64], strides = [1, 1]} : vector<64x64xbf16> to vector<16x64xbf16>
    %cst_53 = arith.constant dense<0.000000e+00> : vector<4x64xf32>
    %144 = tpu.matmul %142, %143, %cst_53 {dimension_numbers = #tpu.dot_dimension_numbers<[1], [0], [0], [1], [0, 0, 1, 1], [], []>} : vector<4x16xbf16>, vector<16x64xbf16>, vector<4x64xf32> -> vector<4x64xf32>
    %145 = arith.addf %120, %144 : vector<4x64xf32>
    %146 = arith.addf %5, %145 : vector<4x64xf32>
    %c0_54 = arith.constant 0 : index
    %c0_55 = arith.constant 0 : index
    %c0_56 = arith.constant 0 : index
    %147 = vector.load %arg10[%c0_54, %c0_55, %c0_56] : memref<2x1x64xf32, #tpu.memory_space<vmem>>, vector<1x1x64xf32>
    %148 = vector.shape_cast %147 : vector<1x1x64xf32> to vector<1x64xf32>
    %c0_57 = arith.constant 0 : index
    %c0_58 = arith.constant 0 : index
    %c0_59 = arith.constant 0 : index
    %149 = vector.load %arg11[%c0_57, %c0_58, %c0_59] : memref<2x1x64xf32, #tpu.memory_space<vmem>>, vector<1x1x64xf32>
    %150 = vector.shape_cast %149 : vector<1x1x64xf32> to vector<1x64xf32>
    %cst_60 = arith.constant dense<0.000000e+00> : vector<4xf32>
    %151 = vector.multi_reduction <add>, %146, %cst_60 [1] : vector<4x64xf32> to vector<4xf32>
    %152 = vector.shape_cast %151 : vector<4xf32> to vector<4x1xf32>
    %cst_61 = arith.constant 6.400000e+01 : f32
    %153 = vector.broadcast %cst_61 : f32 to vector<4x1xf32>
    %154 = arith.divf %152, %153 : vector<4x1xf32>
    %155 = vector.broadcast %154 : vector<4x1xf32> to vector<4x64xf32>
    %156 = arith.subf %146, %155 : vector<4x64xf32>
    %157 = arith.mulf %156, %156 : vector<4x64xf32>
    %cst_62 = arith.constant dense<0.000000e+00> : vector<4xf32>
    %158 = vector.multi_reduction <add>, %157, %cst_62 [1] : vector<4x64xf32> to vector<4xf32>
    %159 = vector.shape_cast %158 : vector<4xf32> to vector<4x1xf32>
    %cst_63 = arith.constant 6.400000e+01 : f32
    %160 = vector.broadcast %cst_63 : f32 to vector<4x1xf32>
    %161 = arith.divf %159, %160 : vector<4x1xf32>
    %162 = vector.broadcast %154 : vector<4x1xf32> to vector<4x64xf32>
    %163 = arith.subf %146, %162 : vector<4x64xf32>
    %cst_64 = arith.constant 9.99999997E-7 : f32
    %164 = vector.broadcast %cst_64 : f32 to vector<4x1xf32>
    %165 = arith.addf %161, %164 : vector<4x1xf32>
    %166 = math.rsqrt %165 : vector<4x1xf32>
    %167 = vector.broadcast %166 : vector<4x1xf32> to vector<4x64xf32>
    %168 = arith.mulf %163, %167 : vector<4x64xf32>
    %169 = vector.broadcast %148 : vector<1x64xf32> to vector<4x64xf32>
    %170 = arith.mulf %168, %169 : vector<4x64xf32>
    %171 = vector.broadcast %150 : vector<1x64xf32> to vector<4x64xf32>
    %172 = arith.addf %170, %171 : vector<4x64xf32>
    %173 = arith.truncf %172 : vector<4x64xf32> to vector<4x64xbf16>
    %c0_65 = arith.constant 0 : index
    %c0_66 = arith.constant 0 : index
    %c0_67 = arith.constant 0 : index
    %174 = vector.load %arg12[%c0_65, %c0_66, %c0_67] : memref<2x64x128xbf16, #tpu.memory_space<vmem>>, vector<1x64x128xbf16>
    %175 = vector.shape_cast %174 : vector<1x64x128xbf16> to vector<64x128xbf16>
    %cst_68 = arith.constant dense<0.000000e+00> : vector<4x128xf32>
    %176 = tpu.matmul %173, %175, %cst_68 {dimension_numbers = #tpu.dot_dimension_numbers<[1], [0], [0], [1], [0, 0, 1, 1], [], []>} : vector<4x64xbf16>, vector<64x128xbf16>, vector<4x128xf32> -> vector<4x128xf32>
    %c0_69 = arith.constant 0 : index
    %c0_70 = arith.constant 0 : index
    %c0_71 = arith.constant 0 : index
    %177 = vector.load %arg13[%c0_69, %c0_70, %c0_71] : memref<2x1x128xf32, #tpu.memory_space<vmem>>, vector<1x1x128xf32>
    %178 = vector.shape_cast %177 : vector<1x1x128xf32> to vector<1x128xf32>
    %179 = vector.broadcast %178 : vector<1x128xf32> to vector<4x128xf32>
    %180 = arith.addf %176, %179 : vector<4x128xf32>
    %181 = arith.mulf %180, %180 : vector<4x128xf32>
    %182 = arith.mulf %180, %181 : vector<4x128xf32>
    %cst_72 = arith.constant 4.471500e-02 : f32
    %183 = vector.broadcast %cst_72 : f32 to vector<4x128xf32>
    %184 = arith.mulf %183, %182 : vector<4x128xf32>
    %185 = arith.addf %180, %184 : vector<4x128xf32>
    %cst_73 = arith.constant 0.797884583 : f32
    %186 = vector.broadcast %cst_73 : f32 to vector<4x128xf32>
    %187 = arith.mulf %186, %185 : vector<4x128xf32>
    %188 = math.tanh %187 : vector<4x128xf32>
    %cst_74 = arith.constant 1.000000e+00 : f32
    %189 = vector.broadcast %cst_74 : f32 to vector<4x128xf32>
    %190 = arith.addf %189, %188 : vector<4x128xf32>
    %cst_75 = arith.constant 5.000000e-01 : f32
    %191 = vector.broadcast %cst_75 : f32 to vector<4x128xf32>
    %192 = arith.mulf %191, %190 : vector<4x128xf32>
    %193 = arith.mulf %180, %192 : vector<4x128xf32>
    %194 = arith.truncf %193 : vector<4x128xf32> to vector<4x128xbf16>
    %c0_76 = arith.constant 0 : index
    %c0_77 = arith.constant 0 : index
    %c0_78 = arith.constant 0 : index
    %195 = vector.load %arg14[%c0_76, %c0_77, %c0_78] : memref<2x128x64xbf16, #tpu.memory_space<vmem>>, vector<1x128x64xbf16>
    %196 = vector.shape_cast %195 : vector<1x128x64xbf16> to vector<128x64xbf16>
    %cst_79 = arith.constant dense<0.000000e+00> : vector<4x64xf32>
    %197 = tpu.matmul %194, %196, %cst_79 {dimension_numbers = #tpu.dot_dimension_numbers<[1], [0], [0], [1], [0, 0, 1, 1], [], []>} : vector<4x128xbf16>, vector<128x64xbf16>, vector<4x64xf32> -> vector<4x64xf32>
    %c0_80 = arith.constant 0 : index
    %c0_81 = arith.constant 0 : index
    %c0_82 = arith.constant 0 : index
    %198 = vector.load %arg15[%c0_80, %c0_81, %c0_82] : memref<2x1x64xf32, #tpu.memory_space<vmem>>, vector<1x1x64xf32>
    %199 = vector.shape_cast %198 : vector<1x1x64xf32> to vector<1x64xf32>
    %200 = vector.broadcast %199 : vector<1x64xf32> to vector<4x64xf32>
    %201 = arith.addf %197, %200 : vector<4x64xf32>
    %202 = arith.addf %146, %201 : vector<4x64xf32>
    %c1 = arith.constant 1 : index
    %c0_83 = arith.constant 0 : index
    %c0_84 = arith.constant 0 : index
    %203 = vector.load %arg4[%c1, %c0_83, %c0_84] : memref<2x1x64xf32, #tpu.memory_space<vmem>>, vector<1x1x64xf32>
    %204 = vector.shape_cast %203 : vector<1x1x64xf32> to vector<1x64xf32>
    %c1_85 = arith.constant 1 : index
    %c0_86 = arith.constant 0 : index
    %c0_87 = arith.constant 0 : index
    %205 = vector.load %arg5[%c1_85, %c0_86, %c0_87] : memref<2x1x64xf32, #tpu.memory_space<vmem>>, vector<1x1x64xf32>
    %206 = vector.shape_cast %205 : vector<1x1x64xf32> to vector<1x64xf32>
    %cst_88 = arith.constant dense<0.000000e+00> : vector<4xf32>
    %207 = vector.multi_reduction <add>, %202, %cst_88 [1] : vector<4x64xf32> to vector<4xf32>
    %208 = vector.shape_cast %207 : vector<4xf32> to vector<4x1xf32>
    %cst_89 = arith.constant 6.400000e+01 : f32
    %209 = vector.broadcast %cst_89 : f32 to vector<4x1xf32>
    %210 = arith.divf %208, %209 : vector<4x1xf32>
    %211 = vector.broadcast %210 : vector<4x1xf32> to vector<4x64xf32>
    %212 = arith.subf %202, %211 : vector<4x64xf32>
    %213 = arith.mulf %212, %212 : vector<4x64xf32>
    %cst_90 = arith.constant dense<0.000000e+00> : vector<4xf32>
    %214 = vector.multi_reduction <add>, %213, %cst_90 [1] : vector<4x64xf32> to vector<4xf32>
    %215 = vector.shape_cast %214 : vector<4xf32> to vector<4x1xf32>
    %cst_91 = arith.constant 6.400000e+01 : f32
    %216 = vector.broadcast %cst_91 : f32 to vector<4x1xf32>
    %217 = arith.divf %215, %216 : vector<4x1xf32>
    %218 = vector.broadcast %210 : vector<4x1xf32> to vector<4x64xf32>
    %219 = arith.subf %202, %218 : vector<4x64xf32>
    %cst_92 = arith.constant 9.99999997E-7 : f32
    %220 = vector.broadcast %cst_92 : f32 to vector<4x1xf32>
    %221 = arith.addf %217, %220 : vector<4x1xf32>
    %222 = math.rsqrt %221 : vector<4x1xf32>
    %223 = vector.broadcast %222 : vector<4x1xf32> to vector<4x64xf32>
    %224 = arith.mulf %219, %223 : vector<4x64xf32>
    %225 = vector.broadcast %204 : vector<1x64xf32> to vector<4x64xf32>
    %226 = arith.mulf %224, %225 : vector<4x64xf32>
    %227 = vector.broadcast %206 : vector<1x64xf32> to vector<4x64xf32>
    %228 = arith.addf %226, %227 : vector<4x64xf32>
    %229 = arith.truncf %228 : vector<4x64xf32> to vector<4x64xbf16>
    %c1_93 = arith.constant 1 : index
    %c0_94 = arith.constant 0 : index
    %c0_95 = arith.constant 0 : index
    %230 = vector.load %arg6[%c1_93, %c0_94, %c0_95] : memref<2x64x192xbf16, #tpu.memory_space<vmem>>, vector<1x64x192xbf16>
    %231 = vector.shape_cast %230 : vector<1x64x192xbf16> to vector<64x192xbf16>
    %cst_96 = arith.constant dense<0.000000e+00> : vector<4x192xf32>
    %232 = tpu.matmul %229, %231, %cst_96 {dimension_numbers = #tpu.dot_dimension_numbers<[1], [0], [0], [1], [0, 0, 1, 1], [], []>} : vector<4x64xbf16>, vector<64x192xbf16>, vector<4x192xf32> -> vector<4x192xf32>
    %c1_97 = arith.constant 1 : index
    %c0_98 = arith.constant 0 : index
    %c0_99 = arith.constant 0 : index
    %233 = vector.load %arg7[%c1_97, %c0_98, %c0_99] : memref<2x1x192xf32, #tpu.memory_space<vmem>>, vector<1x1x192xf32>
    %234 = vector.shape_cast %233 : vector<1x1x192xf32> to vector<1x192xf32>
    %235 = vector.broadcast %234 : vector<1x192xf32> to vector<4x192xf32>
    %236 = arith.addf %232, %235 : vector<4x192xf32>
    %c1_100 = arith.constant 1 : index
    %c0_101 = arith.constant 0 : index
    %c0_102 = arith.constant 0 : index
    %237 = vector.load %arg8[%c1_100, %c0_101, %c0_102] : memref<2x64x64xbf16, #tpu.memory_space<vmem>>, vector<1x64x64xbf16>
    %238 = vector.shape_cast %237 : vector<1x64x64xbf16> to vector<64x64xbf16>
    %c1_103 = arith.constant 1 : index
    %c0_104 = arith.constant 0 : index
    %c0_105 = arith.constant 0 : index
    %239 = vector.load %arg9[%c1_103, %c0_104, %c0_105] : memref<2x1x64xf32, #tpu.memory_space<vmem>>, vector<1x1x64xf32>
    %240 = vector.shape_cast %239 : vector<1x1x64xf32> to vector<1x64xf32>
    %241 = vector.shape_cast %240 : vector<1x64xf32> to vector<1x64xf32>
    %242 = vector.broadcast %241 : vector<1x64xf32> to vector<4x64xf32>
    %243 = vector.extract_strided_slice %236 {offsets = [0, 0], sizes = [4, 16], strides = [1, 1]} : vector<4x192xf32> to vector<4x16xf32>
    %cst_106 = arith.constant 2.500000e-01 : f32
    %244 = vector.broadcast %cst_106 : f32 to vector<4x16xf32>
    %245 = arith.mulf %243, %244 : vector<4x16xf32>
    %246 = vector.extract_strided_slice %236 {offsets = [0, 64], sizes = [4, 16], strides = [1, 1]} : vector<4x192xf32> to vector<4x16xf32>
    %247 = vector.extract_strided_slice %236 {offsets = [0, 128], sizes = [4, 16], strides = [1, 1]} : vector<4x192xf32> to vector<4x16xf32>
    %248 = arith.truncf %245 : vector<4x16xf32> to vector<4x16xbf16>
    %249 = arith.truncf %246 : vector<4x16xf32> to vector<4x16xbf16>
    %cst_107 = arith.constant dense<0.000000e+00> : vector<4x4xf32>
    %250 = tpu.matmul %248, %249, %cst_107 {dimension_numbers = #tpu.dot_dimension_numbers<[1], [1], [0], [0], [0, 0, 1, 0], [], []>} : vector<4x16xbf16>, vector<4x16xbf16>, vector<4x4xf32> -> vector<4x4xf32>
    %cst_108 = arith.constant dense<0xFF800000> : vector<4xf32>
    %251 = vector.multi_reduction <maximumf>, %250, %cst_108 [1] : vector<4x4xf32> to vector<4xf32>
    %252 = vector.shape_cast %251 : vector<4xf32> to vector<4x1xf32>
    %253 = vector.broadcast %252 : vector<4x1xf32> to vector<4x4xf32>
    %254 = arith.subf %250, %253 : vector<4x4xf32>
    %255 = math.exp %254 : vector<4x4xf32>
    %cst_109 = arith.constant dense<0.000000e+00> : vector<4xf32>
    %256 = vector.multi_reduction <add>, %255, %cst_109 [1] : vector<4x4xf32> to vector<4xf32>
    %257 = vector.shape_cast %256 : vector<4xf32> to vector<4x1xf32>
    %258 = tpu.reciprocal %257 {approx = true} : vector<4x1xf32> -> vector<4x1xf32>
    %259 = vector.broadcast %258 : vector<4x1xf32> to vector<4x4xf32>
    %260 = arith.mulf %255, %259 : vector<4x4xf32>
    %261 = arith.truncf %260 : vector<4x4xf32> to vector<4x4xbf16>
    %262 = arith.truncf %247 : vector<4x16xf32> to vector<4x16xbf16>
    %cst_110 = arith.constant dense<0.000000e+00> : vector<4x16xf32>
    %263 = tpu.matmul %261, %262, %cst_110 {dimension_numbers = #tpu.dot_dimension_numbers<[1], [0], [0], [1], [0, 0, 1, 1], [], []>} : vector<4x4xbf16>, vector<4x16xbf16>, vector<4x16xf32> -> vector<4x16xf32>
    %264 = arith.truncf %263 : vector<4x16xf32> to vector<4x16xbf16>
    %265 = vector.extract_strided_slice %238 {offsets = [0, 0], sizes = [16, 64], strides = [1, 1]} : vector<64x64xbf16> to vector<16x64xbf16>
    %cst_111 = arith.constant dense<0.000000e+00> : vector<4x64xf32>
    %266 = tpu.matmul %264, %265, %cst_111 {dimension_numbers = #tpu.dot_dimension_numbers<[1], [0], [0], [1], [0, 0, 1, 1], [], []>} : vector<4x16xbf16>, vector<16x64xbf16>, vector<4x64xf32> -> vector<4x64xf32>
    %267 = arith.addf %242, %266 : vector<4x64xf32>
    %268 = vector.extract_strided_slice %236 {offsets = [0, 16], sizes = [4, 16], strides = [1, 1]} : vector<4x192xf32> to vector<4x16xf32>
    %cst_112 = arith.constant 2.500000e-01 : f32
    %269 = vector.broadcast %cst_112 : f32 to vector<4x16xf32>
    %270 = arith.mulf %268, %269 : vector<4x16xf32>
    %271 = vector.extract_strided_slice %236 {offsets = [0, 80], sizes = [4, 16], strides = [1, 1]} : vector<4x192xf32> to vector<4x16xf32>
    %272 = vector.extract_strided_slice %236 {offsets = [0, 144], sizes = [4, 16], strides = [1, 1]} : vector<4x192xf32> to vector<4x16xf32>
    %273 = arith.truncf %270 : vector<4x16xf32> to vector<4x16xbf16>
    %274 = arith.truncf %271 : vector<4x16xf32> to vector<4x16xbf16>
    %cst_113 = arith.constant dense<0.000000e+00> : vector<4x4xf32>
    %275 = tpu.matmul %273, %274, %cst_113 {dimension_numbers = #tpu.dot_dimension_numbers<[1], [1], [0], [0], [0, 0, 1, 0], [], []>} : vector<4x16xbf16>, vector<4x16xbf16>, vector<4x4xf32> -> vector<4x4xf32>
    %cst_114 = arith.constant dense<0xFF800000> : vector<4xf32>
    %276 = vector.multi_reduction <maximumf>, %275, %cst_114 [1] : vector<4x4xf32> to vector<4xf32>
    %277 = vector.shape_cast %276 : vector<4xf32> to vector<4x1xf32>
    %278 = vector.broadcast %277 : vector<4x1xf32> to vector<4x4xf32>
    %279 = arith.subf %275, %278 : vector<4x4xf32>
    %280 = math.exp %279 : vector<4x4xf32>
    %cst_115 = arith.constant dense<0.000000e+00> : vector<4xf32>
    %281 = vector.multi_reduction <add>, %280, %cst_115 [1] : vector<4x4xf32> to vector<4xf32>
    %282 = vector.shape_cast %281 : vector<4xf32> to vector<4x1xf32>
    %283 = tpu.reciprocal %282 {approx = true} : vector<4x1xf32> -> vector<4x1xf32>
    %284 = vector.broadcast %283 : vector<4x1xf32> to vector<4x4xf32>
    %285 = arith.mulf %280, %284 : vector<4x4xf32>
    %286 = arith.truncf %285 : vector<4x4xf32> to vector<4x4xbf16>
    %287 = arith.truncf %272 : vector<4x16xf32> to vector<4x16xbf16>
    %cst_116 = arith.constant dense<0.000000e+00> : vector<4x16xf32>
    %288 = tpu.matmul %286, %287, %cst_116 {dimension_numbers = #tpu.dot_dimension_numbers<[1], [0], [0], [1], [0, 0, 1, 1], [], []>} : vector<4x4xbf16>, vector<4x16xbf16>, vector<4x16xf32> -> vector<4x16xf32>
    %289 = arith.truncf %288 : vector<4x16xf32> to vector<4x16xbf16>
    %290 = vector.extract_strided_slice %238 {offsets = [16, 0], sizes = [16, 64], strides = [1, 1]} : vector<64x64xbf16> to vector<16x64xbf16>
    %cst_117 = arith.constant dense<0.000000e+00> : vector<4x64xf32>
    %291 = tpu.matmul %289, %290, %cst_117 {dimension_numbers = #tpu.dot_dimension_numbers<[1], [0], [0], [1], [0, 0, 1, 1], [], []>} : vector<4x16xbf16>, vector<16x64xbf16>, vector<4x64xf32> -> vector<4x64xf32>
    %292 = arith.addf %267, %291 : vector<4x64xf32>
    %293 = vector.extract_strided_slice %236 {offsets = [0, 32], sizes = [4, 16], strides = [1, 1]} : vector<4x192xf32> to vector<4x16xf32>
    %cst_118 = arith.constant 2.500000e-01 : f32
    %294 = vector.broadcast %cst_118 : f32 to vector<4x16xf32>
    %295 = arith.mulf %293, %294 : vector<4x16xf32>
    %296 = vector.extract_strided_slice %236 {offsets = [0, 96], sizes = [4, 16], strides = [1, 1]} : vector<4x192xf32> to vector<4x16xf32>
    %297 = vector.extract_strided_slice %236 {offsets = [0, 160], sizes = [4, 16], strides = [1, 1]} : vector<4x192xf32> to vector<4x16xf32>
    %298 = arith.truncf %295 : vector<4x16xf32> to vector<4x16xbf16>
    %299 = arith.truncf %296 : vector<4x16xf32> to vector<4x16xbf16>
    %cst_119 = arith.constant dense<0.000000e+00> : vector<4x4xf32>
    %300 = tpu.matmul %298, %299, %cst_119 {dimension_numbers = #tpu.dot_dimension_numbers<[1], [1], [0], [0], [0, 0, 1, 0], [], []>} : vector<4x16xbf16>, vector<4x16xbf16>, vector<4x4xf32> -> vector<4x4xf32>
    %cst_120 = arith.constant dense<0xFF800000> : vector<4xf32>
    %301 = vector.multi_reduction <maximumf>, %300, %cst_120 [1] : vector<4x4xf32> to vector<4xf32>
    %302 = vector.shape_cast %301 : vector<4xf32> to vector<4x1xf32>
    %303 = vector.broadcast %302 : vector<4x1xf32> to vector<4x4xf32>
    %304 = arith.subf %300, %303 : vector<4x4xf32>
    %305 = math.exp %304 : vector<4x4xf32>
    %cst_121 = arith.constant dense<0.000000e+00> : vector<4xf32>
    %306 = vector.multi_reduction <add>, %305, %cst_121 [1] : vector<4x4xf32> to vector<4xf32>
    %307 = vector.shape_cast %306 : vector<4xf32> to vector<4x1xf32>
    %308 = tpu.reciprocal %307 {approx = true} : vector<4x1xf32> -> vector<4x1xf32>
    %309 = vector.broadcast %308 : vector<4x1xf32> to vector<4x4xf32>
    %310 = arith.mulf %305, %309 : vector<4x4xf32>
    %311 = arith.truncf %310 : vector<4x4xf32> to vector<4x4xbf16>
    %312 = arith.truncf %297 : vector<4x16xf32> to vector<4x16xbf16>
    %cst_122 = arith.constant dense<0.000000e+00> : vector<4x16xf32>
    %313 = tpu.matmul %311, %312, %cst_122 {dimension_numbers = #tpu.dot_dimension_numbers<[1], [0], [0], [1], [0, 0, 1, 1], [], []>} : vector<4x4xbf16>, vector<4x16xbf16>, vector<4x16xf32> -> vector<4x16xf32>
    %314 = arith.truncf %313 : vector<4x16xf32> to vector<4x16xbf16>
    %315 = vector.extract_strided_slice %238 {offsets = [32, 0], sizes = [16, 64], strides = [1, 1]} : vector<64x64xbf16> to vector<16x64xbf16>
    %cst_123 = arith.constant dense<0.000000e+00> : vector<4x64xf32>
    %316 = tpu.matmul %314, %315, %cst_123 {dimension_numbers = #tpu.dot_dimension_numbers<[1], [0], [0], [1], [0, 0, 1, 1], [], []>} : vector<4x16xbf16>, vector<16x64xbf16>, vector<4x64xf32> -> vector<4x64xf32>
    %317 = arith.addf %292, %316 : vector<4x64xf32>
    %318 = vector.extract_strided_slice %236 {offsets = [0, 48], sizes = [4, 16], strides = [1, 1]} : vector<4x192xf32> to vector<4x16xf32>
    %cst_124 = arith.constant 2.500000e-01 : f32
    %319 = vector.broadcast %cst_124 : f32 to vector<4x16xf32>
    %320 = arith.mulf %318, %319 : vector<4x16xf32>
    %321 = vector.extract_strided_slice %236 {offsets = [0, 112], sizes = [4, 16], strides = [1, 1]} : vector<4x192xf32> to vector<4x16xf32>
    %322 = vector.extract_strided_slice %236 {offsets = [0, 176], sizes = [4, 16], strides = [1, 1]} : vector<4x192xf32> to vector<4x16xf32>
    %323 = arith.truncf %320 : vector<4x16xf32> to vector<4x16xbf16>
    %324 = arith.truncf %321 : vector<4x16xf32> to vector<4x16xbf16>
    %cst_125 = arith.constant dense<0.000000e+00> : vector<4x4xf32>
    %325 = tpu.matmul %323, %324, %cst_125 {dimension_numbers = #tpu.dot_dimension_numbers<[1], [1], [0], [0], [0, 0, 1, 0], [], []>} : vector<4x16xbf16>, vector<4x16xbf16>, vector<4x4xf32> -> vector<4x4xf32>
    %cst_126 = arith.constant dense<0xFF800000> : vector<4xf32>
    %326 = vector.multi_reduction <maximumf>, %325, %cst_126 [1] : vector<4x4xf32> to vector<4xf32>
    %327 = vector.shape_cast %326 : vector<4xf32> to vector<4x1xf32>
    %328 = vector.broadcast %327 : vector<4x1xf32> to vector<4x4xf32>
    %329 = arith.subf %325, %328 : vector<4x4xf32>
    %330 = math.exp %329 : vector<4x4xf32>
    %cst_127 = arith.constant dense<0.000000e+00> : vector<4xf32>
    %331 = vector.multi_reduction <add>, %330, %cst_127 [1] : vector<4x4xf32> to vector<4xf32>
    %332 = vector.shape_cast %331 : vector<4xf32> to vector<4x1xf32>
    %333 = tpu.reciprocal %332 {approx = true} : vector<4x1xf32> -> vector<4x1xf32>
    %334 = vector.broadcast %333 : vector<4x1xf32> to vector<4x4xf32>
    %335 = arith.mulf %330, %334 : vector<4x4xf32>
    %336 = arith.truncf %335 : vector<4x4xf32> to vector<4x4xbf16>
    %337 = arith.truncf %322 : vector<4x16xf32> to vector<4x16xbf16>
    %cst_128 = arith.constant dense<0.000000e+00> : vector<4x16xf32>
    %338 = tpu.matmul %336, %337, %cst_128 {dimension_numbers = #tpu.dot_dimension_numbers<[1], [0], [0], [1], [0, 0, 1, 1], [], []>} : vector<4x4xbf16>, vector<4x16xbf16>, vector<4x16xf32> -> vector<4x16xf32>
    %339 = arith.truncf %338 : vector<4x16xf32> to vector<4x16xbf16>
    %340 = vector.extract_strided_slice %238 {offsets = [48, 0], sizes = [16, 64], strides = [1, 1]} : vector<64x64xbf16> to vector<16x64xbf16>
    %cst_129 = arith.constant dense<0.000000e+00> : vector<4x64xf32>
    %341 = tpu.matmul %339, %340, %cst_129 {dimension_numbers = #tpu.dot_dimension_numbers<[1], [0], [0], [1], [0, 0, 1, 1], [], []>} : vector<4x16xbf16>, vector<16x64xbf16>, vector<4x64xf32> -> vector<4x64xf32>
    %342 = arith.addf %317, %341 : vector<4x64xf32>
    %343 = arith.addf %202, %342 : vector<4x64xf32>
    %c1_130 = arith.constant 1 : index
    %c0_131 = arith.constant 0 : index
    %c0_132 = arith.constant 0 : index
    %344 = vector.load %arg10[%c1_130, %c0_131, %c0_132] : memref<2x1x64xf32, #tpu.memory_space<vmem>>, vector<1x1x64xf32>
    %345 = vector.shape_cast %344 : vector<1x1x64xf32> to vector<1x64xf32>
    %c1_133 = arith.constant 1 : index
    %c0_134 = arith.constant 0 : index
    %c0_135 = arith.constant 0 : index
    %346 = vector.load %arg11[%c1_133, %c0_134, %c0_135] : memref<2x1x64xf32, #tpu.memory_space<vmem>>, vector<1x1x64xf32>
    %347 = vector.shape_cast %346 : vector<1x1x64xf32> to vector<1x64xf32>
    %cst_136 = arith.constant dense<0.000000e+00> : vector<4xf32>
    %348 = vector.multi_reduction <add>, %343, %cst_136 [1] : vector<4x64xf32> to vector<4xf32>
    %349 = vector.shape_cast %348 : vector<4xf32> to vector<4x1xf32>
    %cst_137 = arith.constant 6.400000e+01 : f32
    %350 = vector.broadcast %cst_137 : f32 to vector<4x1xf32>
    %351 = arith.divf %349, %350 : vector<4x1xf32>
    %352 = vector.broadcast %351 : vector<4x1xf32> to vector<4x64xf32>
    %353 = arith.subf %343, %352 : vector<4x64xf32>
    %354 = arith.mulf %353, %353 : vector<4x64xf32>
    %cst_138 = arith.constant dense<0.000000e+00> : vector<4xf32>
    %355 = vector.multi_reduction <add>, %354, %cst_138 [1] : vector<4x64xf32> to vector<4xf32>
    %356 = vector.shape_cast %355 : vector<4xf32> to vector<4x1xf32>
    %cst_139 = arith.constant 6.400000e+01 : f32
    %357 = vector.broadcast %cst_139 : f32 to vector<4x1xf32>
    %358 = arith.divf %356, %357 : vector<4x1xf32>
    %359 = vector.broadcast %351 : vector<4x1xf32> to vector<4x64xf32>
    %360 = arith.subf %343, %359 : vector<4x64xf32>
    %cst_140 = arith.constant 9.99999997E-7 : f32
    %361 = vector.broadcast %cst_140 : f32 to vector<4x1xf32>
    %362 = arith.addf %358, %361 : vector<4x1xf32>
    %363 = math.rsqrt %362 : vector<4x1xf32>
    %364 = vector.broadcast %363 : vector<4x1xf32> to vector<4x64xf32>
    %365 = arith.mulf %360, %364 : vector<4x64xf32>
    %366 = vector.broadcast %345 : vector<1x64xf32> to vector<4x64xf32>
    %367 = arith.mulf %365, %366 : vector<4x64xf32>
    %368 = vector.broadcast %347 : vector<1x64xf32> to vector<4x64xf32>
    %369 = arith.addf %367, %368 : vector<4x64xf32>
    %370 = arith.truncf %369 : vector<4x64xf32> to vector<4x64xbf16>
    %c1_141 = arith.constant 1 : index
    %c0_142 = arith.constant 0 : index
    %c0_143 = arith.constant 0 : index
    %371 = vector.load %arg12[%c1_141, %c0_142, %c0_143] : memref<2x64x128xbf16, #tpu.memory_space<vmem>>, vector<1x64x128xbf16>
    %372 = vector.shape_cast %371 : vector<1x64x128xbf16> to vector<64x128xbf16>
    %cst_144 = arith.constant dense<0.000000e+00> : vector<4x128xf32>
    %373 = tpu.matmul %370, %372, %cst_144 {dimension_numbers = #tpu.dot_dimension_numbers<[1], [0], [0], [1], [0, 0, 1, 1], [], []>} : vector<4x64xbf16>, vector<64x128xbf16>, vector<4x128xf32> -> vector<4x128xf32>
    %c1_145 = arith.constant 1 : index
    %c0_146 = arith.constant 0 : index
    %c0_147 = arith.constant 0 : index
    %374 = vector.load %arg13[%c1_145, %c0_146, %c0_147] : memref<2x1x128xf32, #tpu.memory_space<vmem>>, vector<1x1x128xf32>
    %375 = vector.shape_cast %374 : vector<1x1x128xf32> to vector<1x128xf32>
    %376 = vector.broadcast %375 : vector<1x128xf32> to vector<4x128xf32>
    %377 = arith.addf %373, %376 : vector<4x128xf32>
    %378 = arith.mulf %377, %377 : vector<4x128xf32>
    %379 = arith.mulf %377, %378 : vector<4x128xf32>
    %cst_148 = arith.constant 4.471500e-02 : f32
    %380 = vector.broadcast %cst_148 : f32 to vector<4x128xf32>
    %381 = arith.mulf %380, %379 : vector<4x128xf32>
    %382 = arith.addf %377, %381 : vector<4x128xf32>
    %cst_149 = arith.constant 0.797884583 : f32
    %383 = vector.broadcast %cst_149 : f32 to vector<4x128xf32>
    %384 = arith.mulf %383, %382 : vector<4x128xf32>
    %385 = math.tanh %384 : vector<4x128xf32>
    %cst_150 = arith.constant 1.000000e+00 : f32
    %386 = vector.broadcast %cst_150 : f32 to vector<4x128xf32>
    %387 = arith.addf %386, %385 : vector<4x128xf32>
    %cst_151 = arith.constant 5.000000e-01 : f32
    %388 = vector.broadcast %cst_151 : f32 to vector<4x128xf32>
    %389 = arith.mulf %388, %387 : vector<4x128xf32>
    %390 = arith.mulf %377, %389 : vector<4x128xf32>
    %391 = arith.truncf %390 : vector<4x128xf32> to vector<4x128xbf16>
    %c1_152 = arith.constant 1 : index
    %c0_153 = arith.constant 0 : index
    %c0_154 = arith.constant 0 : index
    %392 = vector.load %arg14[%c1_152, %c0_153, %c0_154] : memref<2x128x64xbf16, #tpu.memory_space<vmem>>, vector<1x128x64xbf16>
    %393 = vector.shape_cast %392 : vector<1x128x64xbf16> to vector<128x64xbf16>
    %cst_155 = arith.constant dense<0.000000e+00> : vector<4x64xf32>
    %394 = tpu.matmul %391, %393, %cst_155 {dimension_numbers = #tpu.dot_dimension_numbers<[1], [0], [0], [1], [0, 0, 1, 1], [], []>} : vector<4x128xbf16>, vector<128x64xbf16>, vector<4x64xf32> -> vector<4x64xf32>
    %c1_156 = arith.constant 1 : index
    %c0_157 = arith.constant 0 : index
    %c0_158 = arith.constant 0 : index
    %395 = vector.load %arg15[%c1_156, %c0_157, %c0_158] : memref<2x1x64xf32, #tpu.memory_space<vmem>>, vector<1x1x64xf32>
    %396 = vector.shape_cast %395 : vector<1x1x64xf32> to vector<1x64xf32>
    %397 = vector.broadcast %396 : vector<1x64xf32> to vector<4x64xf32>
    %398 = arith.addf %394, %397 : vector<4x64xf32>
    %399 = arith.addf %343, %398 : vector<4x64xf32>
    %c0_159 = arith.constant 0 : index
    %c0_160 = arith.constant 0 : index
    %400 = vector.load %arg16[%c0_159, %c0_160] : memref<1x64xf32, #tpu.memory_space<vmem>>, vector<1x64xf32>
    %c0_161 = arith.constant 0 : index
    %c0_162 = arith.constant 0 : index
    %401 = vector.load %arg17[%c0_161, %c0_162] : memref<1x64xf32, #tpu.memory_space<vmem>>, vector<1x64xf32>
    %cst_163 = arith.constant dense<0.000000e+00> : vector<4xf32>
    %402 = vector.multi_reduction <add>, %399, %cst_163 [1] : vector<4x64xf32> to vector<4xf32>
    %403 = vector.shape_cast %402 : vector<4xf32> to vector<4x1xf32>
    %cst_164 = arith.constant 6.400000e+01 : f32
    %404 = vector.broadcast %cst_164 : f32 to vector<4x1xf32>
    %405 = arith.divf %403, %404 : vector<4x1xf32>
    %406 = vector.broadcast %405 : vector<4x1xf32> to vector<4x64xf32>
    %407 = arith.subf %399, %406 : vector<4x64xf32>
    %408 = arith.mulf %407, %407 : vector<4x64xf32>
    %cst_165 = arith.constant dense<0.000000e+00> : vector<4xf32>
    %409 = vector.multi_reduction <add>, %408, %cst_165 [1] : vector<4x64xf32> to vector<4xf32>
    %410 = vector.shape_cast %409 : vector<4xf32> to vector<4x1xf32>
    %cst_166 = arith.constant 6.400000e+01 : f32
    %411 = vector.broadcast %cst_166 : f32 to vector<4x1xf32>
    %412 = arith.divf %410, %411 : vector<4x1xf32>
    %413 = vector.broadcast %405 : vector<4x1xf32> to vector<4x64xf32>
    %414 = arith.subf %399, %413 : vector<4x64xf32>
    %cst_167 = arith.constant 9.99999997E-7 : f32
    %415 = vector.broadcast %cst_167 : f32 to vector<4x1xf32>
    %416 = arith.addf %412, %415 : vector<4x1xf32>
    %417 = math.rsqrt %416 : vector<4x1xf32>
    %418 = vector.broadcast %417 : vector<4x1xf32> to vector<4x64xf32>
    %419 = arith.mulf %414, %418 : vector<4x64xf32>
    %420 = vector.broadcast %400 : vector<1x64xf32> to vector<4x64xf32>
    %421 = arith.mulf %419, %420 : vector<4x64xf32>
    %422 = vector.broadcast %401 : vector<1x64xf32> to vector<4x64xf32>
    %423 = arith.addf %421, %422 : vector<4x64xf32>
    %c0_168 = arith.constant 0 : index
    %c0_169 = arith.constant 0 : index
    %c0_170 = arith.constant 0 : index
    %424 = vector.load %arg18[%c0_168, %c0_169, %c0_170] : memref<1x4x64xf32, #tpu.memory_space<vmem>>, vector<1x4x64xf32>
    %425 = vector.shape_cast %424 : vector<1x4x64xf32> to vector<4x64xf32>
    %426 = vector.shape_cast %423 : vector<4x64xf32> to vector<1x4x64xf32>
    tpu.vector_store %arg18[%c0_168, %c0_169, %c0_170], %426 {strides = array<i32>} : memref<1x4x64xf32, #tpu.memory_space<vmem>>, vector<1x4x64xf32>,
    return
  }
  func.func @transform_0(%arg0: i32) -> (i32, i32, i32) {
    %c0_i32 = arith.constant 0 : i32
    %c0_i32_0 = arith.constant 0 : i32
    %c0_i32_1 = arith.constant 0 : i32
    return %arg0, %c0_i32, %c0_i32_0 : i32, i32, i32
  }
  func.func @transform_1(%arg0: i32) -> (i32, i32) {
    %c0_i32 = arith.constant 0 : i32
    %c0_i32_0 = arith.constant 0 : i32
    %c0_i32_1 = arith.constant 0 : i32
    return %c0_i32, %c0_i32_0 : i32, i32
  }
  func.func @transform_2(%arg0: i32) -> (i32, i32) {
    %c0_i32 = arith.constant 0 : i32
    %c0_i32_0 = arith.constant 0 : i32
    %c0_i32_1 = arith.constant 0 : i32
    return %c0_i32, %c0_i32_0 : i32, i32
  }
  func.func @transform_3(%arg0: i32) -> (i32, i32, i32) {
    %c0_i32 = arith.constant 0 : i32
    %c0_i32_0 = arith.constant 0 : i32
    %c0_i32_1 = arith.constant 0 : i32
    %c0_i32_2 = arith.constant 0 : i32
    return %c0_i32, %c0_i32_0, %c0_i32_1 : i32, i32, i32
  }
  func.func @transform_4(%arg0: i32) -> (i32, i32, i32) {
    %c0_i32 = arith.constant 0 : i32
    %c0_i32_0 = arith.constant 0 : i32
    %c0_i32_1 = arith.constant 0 : i32
    %c0_i32_2 = arith.constant 0 : i32
    return %c0_i32, %c0_i32_0, %c0_i32_1 : i32, i32, i32
  }
  func.func @transform_5(%arg0: i32) -> (i32, i32, i32) {
    %c0_i32 = arith.constant 0 : i32
    %c0_i32_0 = arith.constant 0 : i32
    %c0_i32_1 = arith.constant 0 : i32
    %c0_i32_2 = arith.constant 0 : i32
    return %c0_i32, %c0_i32_0, %c0_i32_1 : i32, i32, i32
  }
  func.func @transform_6(%arg0: i32) -> (i32, i32, i32) {
    %c0_i32 = arith.constant 0 : i32
    %c0_i32_0 = arith.constant 0 : i32
    %c0_i32_1 = arith.constant 0 : i32
    %c0_i32_2 = arith.constant 0 : i32
    return %c0_i32, %c0_i32_0, %c0_i32_1 : i32, i32, i32
  }
  func.func @transform_7(%arg0: i32) -> (i32, i32, i32) {
    %c0_i32 = arith.constant 0 : i32
    %c0_i32_0 = arith.constant 0 : i32
    %c0_i32_1 = arith.constant 0 : i32
    %c0_i32_2 = arith.constant 0 : i32
    return %c0_i32, %c0_i32_0, %c0_i32_1 : i32, i32, i32
  }
  func.func @transform_8(%arg0: i32) -> (i32, i32, i32) {
    %c0_i32 = arith.constant 0 : i32
    %c0_i32_0 = arith.constant 0 : i32
    %c0_i32_1 = arith.constant 0 : i32
    %c0_i32_2 = arith.constant 0 : i32
    return %c0_i32, %c0_i32_0, %c0_i32_1 : i32, i32, i32
  }
  func.func @transform_9(%arg0: i32) -> (i32, i32, i32) {
    %c0_i32 = arith.constant 0 : i32
    %c0_i32_0 = arith.constant 0 : i32
    %c0_i32_1 = arith.constant 0 : i32
    %c0_i32_2 = arith.constant 0 : i32
    return %c0_i32, %c0_i32_0, %c0_i32_1 : i32, i32, i32
  }
  func.func @transform_10(%arg0: i32) -> (i32, i32, i32) {
    %c0_i32 = arith.constant 0 : i32
    %c0_i32_0 = arith.constant 0 : i32
    %c0_i32_1 = arith.constant 0 : i32
    %c0_i32_2 = arith.constant 0 : i32
    return %c0_i32, %c0_i32_0, %c0_i32_1 : i32, i32, i32
  }
  func.func @transform_11(%arg0: i32) -> (i32, i32, i32) {
    %c0_i32 = arith.constant 0 : i32
    %c0_i32_0 = arith.constant 0 : i32
    %c0_i32_1 = arith.constant 0 : i32
    %c0_i32_2 = arith.constant 0 : i32
    return %c0_i32, %c0_i32_0, %c0_i32_1 : i32, i32, i32
  }
  func.func @transform_12(%arg0: i32) -> (i32, i32, i32) {
    %c0_i32 = arith.constant 0 : i32
    %c0_i32_0 = arith.constant 0 : i32
    %c0_i32_1 = arith.constant 0 : i32
    %c0_i32_2 = arith.constant 0 : i32
    return %c0_i32, %c0_i32_0, %c0_i32_1 : i32, i32, i32
  }
  func.func @transform_13(%arg0: i32) -> (i32, i32, i32) {
    %c0_i32 = arith.constant 0 : i32
    %c0_i32_0 = arith.constant 0 : i32
    %c0_i32_1 = arith.constant 0 : i32
    %c0_i32_2 = arith.constant 0 : i32
    return %c0_i32, %c0_i32_0, %c0_i32_1 : i32, i32, i32
  }
  func.func @transform_14(%arg0: i32) -> (i32, i32, i32) {
    %c0_i32 = arith.constant 0 : i32
    %c0_i32_0 = arith.constant 0 : i32
    %c0_i32_1 = arith.constant 0 : i32
    %c0_i32_2 = arith.constant 0 : i32
    return %c0_i32, %c0_i32_0, %c0_i32_1 : i32, i32, i32
  }
  func.func @transform_15(%arg0: i32) -> (i32, i32) {
    %c0_i32 = arith.constant 0 : i32
    %c0_i32_0 = arith.constant 0 : i32
    %c0_i32_1 = arith.constant 0 : i32
    return %c0_i32, %c0_i32_0 : i32, i32
  }
  func.func @transform_16(%arg0: i32) -> (i32, i32) {
    %c0_i32 = arith.constant 0 : i32
    %c0_i32_0 = arith.constant 0 : i32
    %c0_i32_1 = arith.constant 0 : i32
    return %c0_i32, %c0_i32_0 : i32, i32
  }
  func.func @transform_17(%arg0: i32) -> (i32, i32, i32) {
    %c0_i32 = arith.constant 0 : i32
    %c0_i32_0 = arith.constant 0 : i32
    %c0_i32_1 = arith.constant 0 : i32
    return %arg0, %c0_i32, %c0_i32_0 : i32, i32, i32
  }
}

</mosaic_0001>

<llo_original>
// kernel: siglip_vision_transformer.1
$region0: #{siglip_vision_transformer.1}
  #allocation0 [shape = 'u32[]', space=smem, size = 0x4, offset = 0x4, fixed_abs, tag = 'smem constant byte address 0x4 - core index']
  #allocation1 [shape = 'u32[72,128]{1,0:T(1,128)}', space=vmem, size = 0x9000, scoped, tag = 'internal scratch']
  %s0 = inlined_call_operand.vmem [shape: bf16[2,4,192], index: 0, kind: input, shape index: {}]
  %s1 = inlined_call_operand.vmem [shape: bf16[192,64], index: 1, kind: input, shape index: {}]
  %s2 = inlined_call_operand.vmem [shape: f32[4,64], index: 2, kind: input, shape index: {}]
  %s3 = inlined_call_operand.vmem [shape: f32[2,1,64], index: 3, kind: input, shape index: {}]
  %s4 = inlined_call_operand.vmem [shape: f32[2,1,64], index: 4, kind: input, shape index: {}]
  %s5 = inlined_call_operand.vmem [shape: bf16[2,64,192], index: 5, kind: input, shape index: {}]
  %s6 = inlined_call_operand.vmem [shape: f32[2,1,192], index: 6, kind: input, shape index: {}]
  %s7 = inlined_call_operand.vmem [shape: bf16[2,64,64], index: 7, kind: input, shape index: {}]
  %s8 = inlined_call_operand.vmem [shape: f32[2,1,64], index: 8, kind: input, shape index: {}]
  %s9 = inlined_call_operand.vmem [shape: f32[2,1,64], index: 9, kind: input, shape index: {}]
  %s10 = inlined_call_operand.vmem [shape: f32[2,1,64], index: 10, kind: input, shape index: {}]
  %s11 = inlined_call_operand.vmem [shape: bf16[2,64,128], index: 11, kind: input, shape index: {}]
  %s12 = inlined_call_operand.vmem [shape: f32[2,1,128], index: 12, kind: input, shape index: {}]
  %s13 = inlined_call_operand.vmem [shape: bf16[2,128,64], index: 13, kind: input, shape index: {}]
  %s14 = inlined_call_operand.vmem [shape: f32[2,1,64], index: 14, kind: input, shape index: {}]
  %s15 = inlined_call_operand.vmem [shape: f32[1,64], index: 15, kind: input, shape index: {}]
  %s16 = inlined_call_operand.vmem [shape: f32[1,64], index: 16, kind: input, shape index: {}]
  %s17 = inlined_call_operand.hbm [shape: f32[2,4,64], index: 17, kind: output, shape index: {}]
  %s18 = sld [smem:[#allocation0]]
  $region101: #{siglip_vision_transformer.1} parent=0
    _
  %s20 = ssub.s32 1, %s18
  %s21 = scalar_select 0, %s20, %s18
  $region1: #{siglip_vision_transformer.1} parent=0
    #allocation2 [shape = 'u8[4096]{0}', space=vmem, size = 0x1000, scoped, tag = 'output window, operand 0']
    #allocation3 [shape = 's32[2]{0}', space=sflag, size = 0x8, scoped, tag = 'scoped memory for siglip_vision_transformer.1']
    %22 = vsyncpa [#allocation3], 0
    %s23 = scalar_lea.sflag [#allocation3], 1
    %24 = vsyncpa %s23, 0
    loop: start=0, step=1, limit=4
    $region2: #{siglip_vision_transformer.1} parent=1 // loop_pre_header
      _
    $region3: #{siglip_vision_transformer.1} parent=1 // loop_header
      %s26 = sphi 0, %s30
      %p27 = scmp.ge.s32.totalorder %s26, 4
      %s36 = sphi 0, %s38
      %s39 = sphi 0, %s36
      %s40 = sphi 0, %s39
      %s56 = sphi 0, %s40
      %s60 = sphi 0, %s60
      %s62 = sphi 0, %s60
      %s63 = sphi 0, %s62
      %s77 = sphi 0, %s63
      %s81 = sphi 0, %s81
      %s83 = sphi 0, %s81
      %s84 = sphi 0, %s83
      %s98 = sphi 0, %s84
      %s102 = sphi 0, %s102
      %s104 = sphi 0, %s102
      %s105 = sphi 0, %s104
      %s119 = sphi 0, %s105
      %s123 = sphi 0, %s123
      %s125 = sphi 0, %s123
      %s126 = sphi 0, %s125
      %s140 = sphi 0, %s126
      %s144 = sphi 0, %s144
      %s146 = sphi 0, %s144
      %s147 = sphi 0, %s146
      %s161 = sphi 0, %s147
      %s165 = sphi 0, %s165
      %s167 = sphi 0, %s165
      %s168 = sphi 0, %s167
      %s182 = sphi 0, %s168
      %s186 = sphi 0, %s186
      %s188 = sphi 0, %s186
      %s189 = sphi 0, %s188
      %s203 = sphi 0, %s189
      %s207 = sphi 0, %s207
      %s209 = sphi 0, %s207
      %s210 = sphi 0, %s209
      %s224 = sphi 0, %s210
      %s228 = sphi 0, %s228
      %s230 = sphi 0, %s228
      %s231 = sphi 0, %s230
      %s245 = sphi 0, %s231
      %s249 = sphi 0, %s249
      %s251 = sphi 0, %s249
      %s252 = sphi 0, %s251
      %s266 = sphi 0, %s252
      %s270 = sphi 0, %s270
      %s272 = sphi 0, %s270
      %s273 = sphi 0, %s272
      %s287 = sphi 0, %s273
      %s291 = sphi 0, %s291
      %s293 = sphi 0, %s291
      %s294 = sphi 0, %s293
      %s308 = sphi 0, %s294
      %s312 = sphi 0, %s312
      %s314 = sphi 0, %s312
      %s315 = sphi 0, %s314
      %s329 = sphi 0, %s315
      %s333 = sphi 0, %s333
      %s335 = sphi 0, %s333
      %s336 = sphi 0, %s335
      %s350 = sphi 0, %s336
      %s354 = sphi 0, %s354
      %s356 = sphi 0, %s354
      %s357 = sphi 0, %s356
      %s371 = sphi 0, %s357
      %s375 = sphi 0, %s375
      %s377 = sphi 0, %s375
      %s378 = sphi 0, %s377
      %s392 = sphi 0, %s378
      %s398 = sphi 0, %s400
      %s401 = sphi 0, %s398
      %s402 = sphi 0, %s401
      %s418 = sphi 0, %s402
    $region4: #{siglip_vision_transformer.1} parent=1 // loop_header_branch
      %29 = sbr.rel (%p27) target = $region8
    $region5: #{siglip_vision_transformer.1} parent=1 // loop_body
      %s31 = ssub.s32 %s26, 1
      %s32 = ssub.s32 %s26, 2
      %s33 = sadd.s32 %s26, 1
      %s34 = ssub.s32 %s26, %s33
      %p35 = scmp.eq.s32.totalorder %s34, 0
      %s37 = sadd.s32 %s36, 1
      %s38 = scalar_select %p35, %s36, %s37
      %p41 = pneg %p35
      %p42 = scmp.eq.s32.totalorder %s26, 1
      %p43 = por %p41, %p42
      %p44 = scmp.ne.s32.totalorder %s36, %s39
      %p45 = scmp.eq.s32.totalorder %s26, 0
      %p46 = por %p44, %p45
      %p47 = scmp.ne.s32.totalorder %s36, %s39
      %p48 = scmp.eq.s32.totalorder %s31, 1
      %p49 = por %p47, %p48
      %p50 = scmp.ne.s32.totalorder %s39, %s40
      %p51 = scmp.eq.s32.totalorder %s31, 0
      %p52 = por %p50, %p51
      %p53 = scmp.ne.s32.totalorder %s39, %s40
      %p54 = scmp.eq.s32.totalorder %s32, 1
      %p55 = por %p53, %p54
      %p57 = scmp.ne.s32.totalorder %s40, %s56
      %p58 = scmp.eq.s32.totalorder %s32, 0
      %p59 = por %p57, %p58
      %s61 = sadd.s32 %s60, 1
      %p64 = scmp.eq.s32.totalorder %s26, 1
      %p65 = scmp.ne.s32.totalorder %s60, %s62
      %p66 = scmp.eq.s32.totalorder %s26, 0
      %p67 = por %p65, %p66
      %p68 = scmp.ne.s32.totalorder %s60, %s62
      %p69 = scmp.eq.s32.totalorder %s31, 1
      %p70 = por %p68, %p69
      %p71 = scmp.ne.s32.totalorder %s62, %s63
      %p72 = scmp.eq.s32.totalorder %s31, 0
      %p73 = por %p71, %p72
      %p74 = scmp.ne.s32.totalorder %s62, %s63
      %p75 = scmp.eq.s32.totalorder %s32, 1
      %p76 = por %p74, %p75
      %p78 = scmp.ne.s32.totalorder %s63, %s77
      %p79 = scmp.eq.s32.totalorder %s32, 0
      %p80 = por %p78, %p79
      %s82 = sadd.s32 %s81, 1
      %p85 = scmp.eq.s32.totalorder %s26, 1
      %p86 = scmp.ne.s32.totalorder %s81, %s83
      %p87 = scmp.eq.s32.totalorder %s26, 0
      %p88 = por %p86, %p87
      %p89 = scmp.ne.s32.totalorder %s81, %s83
      %p90 = scmp.eq.s32.totalorder %s31, 1
      %p91 = por %p89, %p90
      %p92 = scmp.ne.s32.totalorder %s83, %s84
      %p93 = scmp.eq.s32.totalorder %s31, 0
      %p94 = por %p92, %p93
      %p95 = scmp.ne.s32.totalorder %s83, %s84
      %p96 = scmp.eq.s32.totalorder %s32, 1
      %p97 = por %p95, %p96
      %p99 = scmp.ne.s32.totalorder %s84, %s98
      %p100 = scmp.eq.s32.totalorder %s32, 0
      %p101 = por %p99, %p100
      %s103 = sadd.s32 %s102, 1
      %p106 = scmp.eq.s32.totalorder %s26, 1
      %p107 = scmp.ne.s32.totalorder %s102, %s104
      %p108 = scmp.eq.s32.totalorder %s26, 0
      %p109 = por %p107, %p108
      %p110 = scmp.ne.s32.totalorder %s102, %s104
      %p111 = scmp.eq.s32.totalorder %s31, 1
      %p112 = por %p110, %p111
      %p113 = scmp.ne.s32.totalorder %s104, %s105
      %p114 = scmp.eq.s32.totalorder %s31, 0
      %p115 = por %p113, %p114
      %p116 = scmp.ne.s32.totalorder %s104, %s105
      %p117 = scmp.eq.s32.totalorder %s32, 1
      %p118 = por %p116, %p117
      %p120 = scmp.ne.s32.totalorder %s105, %s119
      %p121 = scmp.eq.s32.totalorder %s32, 0
      %p122 = por %p120, %p121
      %s124 = sadd.s32 %s123, 1
      %p127 = scmp.eq.s32.totalorder %s26, 1
      %p128 = scmp.ne.s32.totalorder %s123, %s125
      %p129 = scmp.eq.s32.totalorder %s26, 0
      %p130 = por %p128, %p129
      %p131 = scmp.ne.s32.totalorder %s123, %s125
      %p132 = scmp.eq.s32.totalorder %s31, 1
      %p133 = por %p131, %p132
      %p134 = scmp.ne.s32.totalorder %s125, %s126
      %p135 = scmp.eq.s32.totalorder %s31, 0
      %p136 = por %p134, %p135
      %p137 = scmp.ne.s32.totalorder %s125, %s126
      %p138 = scmp.eq.s32.totalorder %s32, 1
      %p139 = por %p137, %p138
      %p141 = scmp.ne.s32.totalorder %s126, %s140
      %p142 = scmp.eq.s32.totalorder %s32, 0
      %p143 = por %p141, %p142
      %s145 = sadd.s32 %s144, 1
      %p148 = scmp.eq.s32.totalorder %s26, 1
      %p149 = scmp.ne.s32.totalorder %s144, %s146
      %p150 = scmp.eq.s32.totalorder %s26, 0
      %p151 = por %p149, %p150
      %p152 = scmp.ne.s32.totalorder %s144, %s146
      %p153 = scmp.eq.s32.totalorder %s31, 1
      %p154 = por %p152, %p153
      %p155 = scmp.ne.s32.totalorder %s146, %s147
      %p156 = scmp.eq.s32.totalorder %s31, 0
      %p157 = por %p155, %p156
      %p158 = scmp.ne.s32.totalorder %s146, %s147
      %p159 = scmp.eq.s32.totalorder %s32, 1
      %p160 = por %p158, %p159
      %p162 = scmp.ne.s32.totalorder %s147, %s161
      %p163 = scmp.eq.s32.totalorder %s32, 0
      %p164 = por %p162, %p163
      %s166 = sadd.s32 %s165, 1
      %p169 = scmp.eq.s32.totalorder %s26, 1
      %p170 = scmp.ne.s32.totalorder %s165, %s167
      %p171 = scmp.eq.s32.totalorder %s26, 0
      %p172 = por %p170, %p171
      %p173 = scmp.ne.s32.totalorder %s165, %s167
      %p174 = scmp.eq.s32.totalorder %s31, 1
      %p175 = por %p173, %p174
      %p176 = scmp.ne.s32.totalorder %s167, %s168
      %p177 = scmp.eq.s32.totalorder %s31, 0
      %p178 = por %p176, %p177
      %p179 = scmp.ne.s32.totalorder %s167, %s168
      %p180 = scmp.eq.s32.totalorder %s32, 1
      %p181 = por %p179, %p180
      %p183 = scmp.ne.s32.totalorder %s168, %s182
      %p184 = scmp.eq.s32.totalorder %s32, 0
      %p185 = por %p183, %p184
      %s187 = sadd.s32 %s186, 1
      %p190 = scmp.eq.s32.totalorder %s26, 1
      %p191 = scmp.ne.s32.totalorder %s186, %s188
      %p192 = scmp.eq.s32.totalorder %s26, 0
      %p193 = por %p191, %p192
      %p194 = scmp.ne.s32.totalorder %s186, %s188
      %p195 = scmp.eq.s32.totalorder %s31, 1
      %p196 = por %p194, %p195
      %p197 = scmp.ne.s32.totalorder %s188, %s189
      %p198 = scmp.eq.s32.totalorder %s31, 0
      %p199 = por %p197, %p198
      %p200 = scmp.ne.s32.totalorder %s188, %s189
      %p201 = scmp.eq.s32.totalorder %s32, 1
      %p202 = por %p200, %p201
      %p204 = scmp.ne.s32.totalorder %s189, %s203
      %p205 = scmp.eq.s32.totalorder %s32, 0
      %p206 = por %p204, %p205
      %s208 = sadd.s32 %s207, 1
      %p211 = scmp.eq.s32.totalorder %s26, 1
      %p212 = scmp.ne.s32.totalorder %s207, %s209
      %p213 = scmp.eq.s32.totalorder %s26, 0
      %p214 = por %p212, %p213
      %p215 = scmp.ne.s32.totalorder %s207, %s209
      %p216 = scmp.eq.s32.totalorder %s31, 1
      %p217 = por %p215, %p216
      %p218 = scmp.ne.s32.totalorder %s209, %s210
      %p219 = scmp.eq.s32.totalorder %s31, 0
      %p220 = por %p218, %p219
      %p221 = scmp.ne.s32.totalorder %s209, %s210
      %p222 = scmp.eq.s32.totalorder %s32, 1
      %p223 = por %p221, %p222
      %p225 = scmp.ne.s32.totalorder %s210, %s224
      %p226 = scmp.eq.s32.totalorder %s32, 0
      %p227 = por %p225, %p226
      %s229 = sadd.s32 %s228, 1
      %p232 = scmp.eq.s32.totalorder %s26, 1
      %p233 = scmp.ne.s32.totalorder %s228, %s230
      %p234 = scmp.eq.s32.totalorder %s26, 0
      %p235 = por %p233, %p234
      %p236 = scmp.ne.s32.totalorder %s228, %s230
      %p237 = scmp.eq.s32.totalorder %s31, 1
      %p238 = por %p236, %p237
      %p239 = scmp.ne.s32.totalorder %s230, %s231
      %p240 = scmp.eq.s32.totalorder %s31, 0
      %p241 = por %p239, %p240
      %p242 = scmp.ne.s32.totalorder %s230, %s231
      %p243 = scmp.eq.s32.totalorder %s32, 1
      %p244 = por %p242, %p243
      %p246 = scmp.ne.s32.totalorder %s231, %s245
      %p247 = scmp.eq.s32.totalorder %s32, 0
      %p248 = por %p246, %p247
      %s250 = sadd.s32 %s249, 1
      %p253 = scmp.eq.s32.totalorder %s26, 1
      %p254 = scmp.ne.s32.totalorder %s249, %s251
      %p255 = scmp.eq.s32.totalorder %s26, 0
      %p256 = por %p254, %p255
      %p257 = scmp.ne.s32.totalorder %s249, %s251
      %p258 = scmp.eq.s32.totalorder %s31, 1
      %p259 = por %p257, %p258
      %p260 = scmp.ne.s32.totalorder %s251, %s252
      %p261 = scmp.eq.s32.totalorder %s31, 0
      %p262 = por %p260, %p261
      %p263 = scmp.ne.s32.totalorder %s251, %s252
      %p264 = scmp.eq.s32.totalorder %s32, 1
      %p265 = por %p263, %p264
      %p267 = scmp.ne.s32.totalorder %s252, %s266
      %p268 = scmp.eq.s32.totalorder %s32, 0
      %p269 = por %p267, %p268
      %s271 = sadd.s32 %s270, 1
      %p274 = scmp.eq.s32.totalorder %s26, 1
      %p275 = scmp.ne.s32.totalorder %s270, %s272
      %p276 = scmp.eq.s32.totalorder %s26, 0
      %p277 = por %p275, %p276
      %p278 = scmp.ne.s32.totalorder %s270, %s272
      %p279 = scmp.eq.s32.totalorder %s31, 1
      %p280 = por %p278, %p279
      %p281 = scmp.ne.s32.totalorder %s272, %s273
      %p282 = scmp.eq.s32.totalorder %s31, 0
      %p283 = por %p281, %p282
      %p284 = scmp.ne.s32.totalorder %s272, %s273
      %p285 = scmp.eq.s32.totalorder %s32, 1
      %p286 = por %p284, %p285
      %p288 = scmp.ne.s32.totalorder %s273, %s287
      %p289 = scmp.eq.s32.totalorder %s32, 0
      %p290 = por %p288, %p289
      %s292 = sadd.s32 %s291, 1
      %p295 = scmp.eq.s32.totalorder %s26, 1
      %p296 = scmp.ne.s32.totalorder %s291, %s293
      %p297 = scmp.eq.s32.totalorder %s26, 0
      %p298 = por %p296, %p297
      %p299 = scmp.ne.s32.totalorder %s291, %s293
      %p300 = scmp.eq.s32.totalorder %s31, 1
      %p301 = por %p299, %p300
      %p302 = scmp.ne.s32.totalorder %s293, %s294
      %p303 = scmp.eq.s32.totalorder %s31, 0
      %p304 = por %p302, %p303
      %p305 = scmp.ne.s32.totalorder %s293, %s294
      %p306 = scmp.eq.s32.totalorder %s32, 1
      %p307 = por %p305, %p306
      %p309 = scmp.ne.s32.totalorder %s294, %s308
      %p310 = scmp.eq.s32.totalorder %s32, 0
      %p311 = por %p309, %p310
      %s313 = sadd.s32 %s312, 1
      %p316 = scmp.eq.s32.totalorder %s26, 1
      %p317 = scmp.ne.s32.totalorder %s312, %s314
      %p318 = scmp.eq.s32.totalorder %s26, 0
      %p319 = por %p317, %p318
      %p320 = scmp.ne.s32.totalorder %s312, %s314
      %p321 = scmp.eq.s32.totalorder %s31, 1
      %p322 = por %p320, %p321
      %p323 = scmp.ne.s32.totalorder %s314, %s315
      %p324 = scmp.eq.s32.totalorder %s31, 0
      %p325 = por %p323, %p324
      %p326 = scmp.ne.s32.totalorder %s314, %s315
      %p327 = scmp.eq.s32.totalorder %s32, 1
      %p328 = por %p326, %p327
      %p330 = scmp.ne.s32.totalorder %s315, %s329
      %p331 = scmp.eq.s32.totalorder %s32, 0
      %p332 = por %p330, %p331
      %s334 = sadd.s32 %s333, 1
      %p337 = scmp.eq.s32.totalorder %s26, 1
      %p338 = scmp.ne.s32.totalorder %s333, %s335
      %p339 = scmp.eq.s32.totalorder %s26, 0
      %p340 = por %p338, %p339
      %p341 = scmp.ne.s32.totalorder %s333, %s335
      %p342 = scmp.eq.s32.totalorder %s31, 1
      %p343 = por %p341, %p342
      %p344 = scmp.ne.s32.totalorder %s335, %s336
      %p345 = scmp.eq.s32.totalorder %s31, 0
      %p346 = por %p344, %p345
      %p347 = scmp.ne.s32.totalorder %s335, %s336
      %p348 = scmp.eq.s32.totalorder %s32, 1
      %p349 = por %p347, %p348
      %p351 = scmp.ne.s32.totalorder %s336, %s350
      %p352 = scmp.eq.s32.totalorder %s32, 0
      %p353 = por %p351, %p352
      %s355 = sadd.s32 %s354, 1
      %p358 = scmp.eq.s32.totalorder %s26, 1
      %p359 = scmp.ne.s32.totalorder %s354, %s356
      %p360 = scmp.eq.s32.totalorder %s26, 0
      %p361 = por %p359, %p360
      %p362 = scmp.ne.s32.totalorder %s354, %s356
      %p363 = scmp.eq.s32.totalorder %s31, 1
      %p364 = por %p362, %p363
      %p365 = scmp.ne.s32.totalorder %s356, %s357
      %p366 = scmp.eq.s32.totalorder %s31, 0
      %p367 = por %p365, %p366
      %p368 = scmp.ne.s32.totalorder %s356, %s357
      %p369 = scmp.eq.s32.totalorder %s32, 1
      %p370 = por %p368, %p369
      %p372 = scmp.ne.s32.totalorder %s357, %s371
      %p373 = scmp.eq.s32.totalorder %s32, 0
      %p374 = por %p372, %p373
      %s376 = sadd.s32 %s375, 1
      %p379 = scmp.eq.s32.totalorder %s26, 1
      %p380 = scmp.ne.s32.totalorder %s375, %s377
      %p381 = scmp.eq.s32.totalorder %s26, 0
      %p382 = por %p380, %p381
      %p383 = scmp.ne.s32.totalorder %s375, %s377
      %p384 = scmp.eq.s32.totalorder %s31, 1
      %p385 = por %p383, %p384
      %p386 = scmp.ne.s32.totalorder %s377, %s378
      %p387 = scmp.eq.s32.totalorder %s31, 0
      %p388 = por %p386, %p387
      %p389 = scmp.ne.s32.totalorder %s377, %s378
      %p390 = scmp.eq.s32.totalorder %s32, 1
      %p391 = por %p389, %p390
      %p393 = scmp.ne.s32.totalorder %s378, %s392
      %p394 = scmp.eq.s32.totalorder %s32, 0
      %p395 = por %p393, %p394
      %s396 = ssub.s32 %s26, %s33
      %p397 = scmp.eq.s32.totalorder %s396, 0
      %s399 = sadd.s32 %s398, 1
      %s400 = scalar_select %p397, %s398, %s399
      %p403 = pneg %p397
      %p404 = scmp.eq.s32.totalorder %s26, 1
      %p405 = por %p403, %p404
      %p406 = scmp.ne.s32.totalorder %s398, %s401
      %p407 = scmp.eq.s32.totalorder %s26, 0
      %p408 = por %p406, %p407
      %p409 = scmp.ne.s32.totalorder %s398, %s401
      %p410 = scmp.eq.s32.totalorder %s31, 1
      %p411 = por %p409, %p410
      %p412 = scmp.ne.s32.totalorder %s401, %s402
      %p413 = scmp.eq.s32.totalorder %s31, 0
      %p414 = por %p412, %p413
      %p415 = scmp.ne.s32.totalorder %s401, %s402
      %p416 = scmp.eq.s32.totalorder %s32, 1
      %p417 = por %p415, %p416
      %p419 = scmp.ne.s32.totalorder %s402, %s418
      %p420 = scmp.eq.s32.totalorder %s32, 0
      %p421 = por %p419, %p420
      %p422 = scmp.le.s32.totalorder 1, %s26
      %p423 = scmp.lt.s32.totalorder %s26, 3
      %p424 = pnand %p422, %p423
      %p425 = pneg %p424
      // Predicated region
      $region9: #{siglip_vision_transformer.1} parent=5 // pred_check
        _
      $region10: #{siglip_vision_transformer.1} parent=5 // pred_check_branch
        %427 = sbr.rel (%p424) target = $region12
      $region11: #{siglip_vision_transformer.1} parent=5 // pred_region
        %s428 = ssub.s32 %s26, 1
        // Predicated region
        $region13: #{siglip_vision_transformer.1} parent=11 // pred_check
          %p429 = pneg %p73
        $region14: #{siglip_vision_transformer.1} parent=11 // pred_check_branch
          %431 = sbr.rel (%p429) target = $region16
        $region15: #{siglip_vision_transformer.1} parent=11 // pred_region
          _
        $region16: #{siglip_vision_transformer.1} parent=11 // pred_fallthru
          _
        // Predicated region
        $region17: #{siglip_vision_transformer.1} parent=11 // pred_check
          %p432 = pneg %p94
        $region18: #{siglip_vision_transformer.1} parent=11 // pred_check_branch
          %434 = sbr.rel (%p432) target = $region20
        $region19: #{siglip_vision_transformer.1} parent=11 // pred_region
          _
        $region20: #{siglip_vision_transformer.1} parent=11 // pred_fallthru
          _
        // Predicated region
        $region21: #{siglip_vision_transformer.1} parent=11 // pred_check
          %p435 = pneg %p115
        $region22: #{siglip_vision_transformer.1} parent=11 // pred_check_branch
          %437 = sbr.rel (%p435) target = $region24
        $region23: #{siglip_vision_transformer.1} parent=11 // pred_region
          _
        $region24: #{siglip_vision_transformer.1} parent=11 // pred_fallthru
          _
        // Predicated region
        $region25: #{siglip_vision_transformer.1} parent=11 // pred_check
          %p438 = pneg %p136
        $region26: #{siglip_vision_transformer.1} parent=11 // pred_check_branch
          %440 = sbr.rel (%p438) target = $region28
        $region27: #{siglip_vision_transformer.1} parent=11 // pred_region
          _
        $region28: #{siglip_vision_transformer.1} parent=11 // pred_fallthru
          _
        // Predicated region
        $region29: #{siglip_vision_transformer.1} parent=11 // pred_check
          %p441 = pneg %p157
        $region30: #{siglip_vision_transformer.1} parent=11 // pred_check_branch
          %443 = sbr.rel (%p441) target = $region32
        $region31: #{siglip_vision_transformer.1} parent=11 // pred_region
          _
        $region32: #{siglip_vision_transformer.1} parent=11 // pred_fallthru
          _
        // Predicated region
        $region33: #{siglip_vision_transformer.1} parent=11 // pred_check
          %p444 = pneg %p178
        $region34: #{siglip_vision_transformer.1} parent=11 // pred_check_branch
          %446 = sbr.rel (%p444) target = $region36
        $region35: #{siglip_vision_transformer.1} parent=11 // pred_region
          _
        $region36: #{siglip_vision_transformer.1} parent=11 // pred_fallthru
          _
        // Predicated region
        $region37: #{siglip_vision_transformer.1} parent=11 // pred_check
          %p447 = pneg %p199
        $region38: #{siglip_vision_transformer.1} parent=11 // pred_check_branch
          %449 = sbr.rel (%p447) target = $region40
        $region39: #{siglip_vision_transformer.1} parent=11 // pred_region
          _
        $region40: #{siglip_vision_transformer.1} parent=11 // pred_fallthru
          _
        // Predicated region
        $region41: #{siglip_vision_transformer.1} parent=11 // pred_check
          %p450 = pneg %p220
        $region42: #{siglip_vision_transformer.1} parent=11 // pred_check_branch
          %452 = sbr.rel (%p450) target = $region44
        $region43: #{siglip_vision_transformer.1} parent=11 // pred_region
          _
        $region44: #{siglip_vision_transformer.1} parent=11 // pred_fallthru
          _
        // Predicated region
        $region45: #{siglip_vision_transformer.1} parent=11 // pred_check
          %p453 = pneg %p241
        $region46: #{siglip_vision_transformer.1} parent=11 // pred_check_branch
          %455 = sbr.rel (%p453) target = $region48
        $region47: #{siglip_vision_transformer.1} parent=11 // pred_region
          _
        $region48: #{siglip_vision_transformer.1} parent=11 // pred_fallthru
          _
        // Predicated region
        $region49: #{siglip_vision_transformer.1} parent=11 // pred_check
          %p456 = pneg %p262
        $region50: #{siglip_vision_transformer.1} parent=11 // pred_check_branch
          %458 = sbr.rel (%p456) target = $region52
        $region51: #{siglip_vision_transformer.1} parent=11 // pred_region
          _
        $region52: #{siglip_vision_transformer.1} parent=11 // pred_fallthru
          _
        // Predicated region
        $region53: #{siglip_vision_transformer.1} parent=11 // pred_check
          %p459 = pneg %p283
        $region54: #{siglip_vision_transformer.1} parent=11 // pred_check_branch
          %461 = sbr.rel (%p459) target = $region56
        $region55: #{siglip_vision_transformer.1} parent=11 // pred_region
          _
        $region56: #{siglip_vision_transformer.1} parent=11 // pred_fallthru
          _
        // Predicated region
        $region57: #{siglip_vision_transformer.1} parent=11 // pred_check
          %p462 = pneg %p304
        $region58: #{siglip_vision_transformer.1} parent=11 // pred_check_branch
          %464 = sbr.rel (%p462) target = $region60
        $region59: #{siglip_vision_transformer.1} parent=11 // pred_region
          _
        $region60: #{siglip_vision_transformer.1} parent=11 // pred_fallthru
          _
        // Predicated region
        $region61: #{siglip_vision_transformer.1} parent=11 // pred_check
          %p465 = pneg %p325
        $region62: #{siglip_vision_transformer.1} parent=11 // pred_check_branch
          %467 = sbr.rel (%p465) target = $region64
        $region63: #{siglip_vision_transformer.1} parent=11 // pred_region
          _
        $region64: #{siglip_vision_transformer.1} parent=11 // pred_fallthru
          _
        // Predicated region
        $region65: #{siglip_vision_transformer.1} parent=11 // pred_check
          %p468 = pneg %p346
        $region66: #{siglip_vision_transformer.1} parent=11 // pred_check_branch
          %470 = sbr.rel (%p468) target = $region68
        $region67: #{siglip_vision_transformer.1} parent=11 // pred_region
          _
        $region68: #{siglip_vision_transformer.1} parent=11 // pred_fallthru
          _
        // Predicated region
        $region69: #{siglip_vision_transformer.1} parent=11 // pred_check
          %p471 = pneg %p367
        $region70: #{siglip_vision_transformer.1} parent=11 // pred_check_branch
          %473 = sbr.rel (%p471) target = $region72
        $region71: #{siglip_vision_transformer.1} parent=11 // pred_region
          _
        $region72: #{siglip_vision_transformer.1} parent=11 // pred_fallthru
          _
        // Predicated region
        $region73: #{siglip_vision_transformer.1} parent=11 // pred_check
          %p474 = pneg %p388
        $region74: #{siglip_vision_transformer.1} parent=11 // pred_check_branch
          %476 = sbr.rel (%p474) target = $region76
        $region75: #{siglip_vision_transformer.1} parent=11 // pred_region
          _
        $region76: #{siglip_vision_transformer.1} parent=11 // pred_fallthru
          _
      $region12: #{siglip_vision_transformer.1} parent=5 // pred_fallthru
        _
      %p477 = scmp.lt.s32.totalorder %s26, 2
      // Predicated region
      $region77: #{siglip_vision_transformer.1} parent=5 // pred_check
        %p478 = pneg %p477
      $region78: #{siglip_vision_transformer.1} parent=5 // pred_check_branch
        %480 = sbr.rel (%p478) target = $region80
      $region79: #{siglip_vision_transformer.1} parent=5 // pred_region
        // Predicated region
        $region81: #{siglip_vision_transformer.1} parent=79 // pred_check
          %p481 = pneg %p46
        $region82: #{siglip_vision_transformer.1} parent=79 // pred_check_branch
          %483 = sbr.rel (%p481) target = $region84
        $region83: #{siglip_vision_transformer.1} parent=79 // pred_region
          %p484 = scmp.lt.s32.totalorder %s26, 1
          %s485 = scalar_select %p484, %s26, 1
          %s486 = smul.addr %s485, 2
          %s487 = smul.addr %s486, 2
          %s488 = scalar_lea.vmem %s0, %s487
        $region84: #{siglip_vision_transformer.1} parent=79 // pred_fallthru
          _
      $region80: #{siglip_vision_transformer.1} parent=5 // pred_fallthru
        _
      %p489 = scmp.le.s32.totalorder 1, %s26
      %p490 = scmp.lt.s32.totalorder %s26, 3
      %p491 = pnand %p489, %p490
      %p492 = pneg %p491
      // Predicated region
      $region85: #{siglip_vision_transformer.1} parent=5 // pred_check
        _
      $region86: #{siglip_vision_transformer.1} parent=5 // pred_check_branch
        %494 = sbr.rel (%p491) target = $region88
      $region87: #{siglip_vision_transformer.1} parent=5 // pred_region
        %s495 = ssub.s32 %s26, 1
        %p496 = scmp.lt.s32.totalorder %s31, 1
        %s497 = scalar_select %p496, %s31, 1
        %s498 = smul.addr %s497, 2
        %s499 = smul.addr %s498, 2
        %s500 = scalar_lea.vmem %s0, %s499
        %p501 = pneg %p52
        %p502 = pneg %p49
        %p503 = pneg %p73
        %p504 = pneg %p70
        %p505 = pneg %p94
        %p506 = pneg %p91
        %p507 = pneg %p115
        %p508 = pneg %p112
        %p509 = pneg %p136
        %p510 = pneg %p133
        %p511 = pneg %p157
        %p512 = pneg %p154
        %p513 = pneg %p178
        %p514 = pneg %p175
        %p515 = pneg %p199
        %p516 = pneg %p196
        %p517 = pneg %p220
        %p518 = pneg %p217
        %p519 = pneg %p241
        %p520 = pneg %p238
        %p521 = pneg %p262
        %p522 = pneg %p259
        %p523 = pneg %p283
        %p524 = pneg %p280
        %p525 = pneg %p304
        %p526 = pneg %p301
        %p527 = pneg %p325
        %p528 = pneg %p322
        %p529 = pneg %p346
        %p530 = pneg %p343
        %p531 = pneg %p367
        %p532 = pneg %p364
        %p533 = pneg %p388
        %p534 = pneg %p385
        %p535 = pneg %p414
        %p536 = pneg %p411
        %s537 = sand.u32 %s401, 1
        %s538 = scalar_lea.sflag [#allocation3], %s537
        %s539 = sand.u32 %s401, 1
        %s540 = smul.addr %s539, 4
        %s541 = scalar_lea.vmem [#allocation2], %s540
        %p542 = scmp.lt.s32.totalorder %s31, 1
        %s543 = scalar_select %p542, %s31, 1
        %s544 = smul.addr %s543, 2
        %s545 = smul.addr %s544, 2
        %s546 = scalar_lea.vmem %s0, %s545
        %v548 = vld [vmem:[%s546] sm:$0xf]
        %v549 = vld [vmem:[%s1] sm:$0xf]
        %v550 = vld [vmem:[%s1 + $0x4] sm:$0xf]
        %v551 = vld [vmem:[%s1 + $0x8] sm:$0xf]
        %v552 = vld [vmem:[%s1 + $0xc] sm:$0xf]
        %v553 = vld [vmem:[%s1 + $0x10] sm:$0xf]
        %v554 = vld [vmem:[%s1 + $0x14] sm:$0xf]
        %v555 = vld [vmem:[%s1 + $0x18] sm:$0xf]
        %v556 = vld [vmem:[%s1 + $0x1c] sm:$0xf]
        %v557 = vld [vmem:[%s1 + $0x20] sm:$0xf]
        %v558 = vld [vmem:[%s1 + $0x24] sm:$0xf]
        %v559 = vld [vmem:[%s1 + $0x28] sm:$0xf]
        %v560 = vld [vmem:[%s1 + $0x2c] sm:$0xf]
        %v561 = vld [vmem:[%s1 + $0x30] sm:$0xf]
        %v562 = vld [vmem:[%s1 + $0x34] sm:$0xf]
        %v563 = vld [vmem:[%s1 + $0x38] sm:$0xf]
        %v564 = vld [vmem:[%s1 + $0x3c] sm:$0xf]
        %v565 = vld [vmem:[%s1 + $0x40] sm:$0xf]
        %v566 = vld [vmem:[%s1 + $0x44] sm:$0xf]
        %v567 = vld [vmem:[%s1 + $0x48] sm:$0xf]
        %v568 = vld [vmem:[%s1 + $0x4c] sm:$0xf]
        %v569 = vld [vmem:[%s1 + $0x50] sm:$0xf]
        %v570 = vld [vmem:[%s1 + $0x54] sm:$0xf]
        %v571 = vld [vmem:[%s1 + $0x58] sm:$0xf]
        %v572 = vld [vmem:[%s1 + $0x5c] sm:$0xf]
        %v573 = vld [vmem:[%s2] sm:$0xf]
        %575 = vst [vmem:[#allocation1] ss:$4 sm:$0xff] %v548
        %v576 = vld.sshfl [vmem:[#allocation1] sm:$0xff pattern:$0x73625140]
        %v577 = vld.sshfl [vmem:[#allocation1 + $0x8] sm:$0xff pattern:$0x73625140]
        %v603 = vunpack.c.l.b16 %v549
        %v604 = vunpack.c.l.b16 %v550
        %v605 = vunpack.c.l.b16 %v551
        %v606 = vunpack.c.l.b16 %v552
        %v607 = vunpack.c.l.b16 %v553
        %v608 = vunpack.c.l.b16 %v554
        %v609 = vunpack.c.l.b16 %v555
        %v610 = vunpack.c.l.b16 %v556
        %v611 = vunpack.c.l.b16 %v557
        %v612 = vunpack.c.l.b16 %v558
        %v613 = vunpack.c.l.b16 %v559
        %v614 = vunpack.c.l.b16 %v560
        %v615 = vunpack.c.l.b16 %v561
        %v616 = vunpack.c.l.b16 %v562
        %v617 = vunpack.c.l.b16 %v563
        %v618 = vunpack.c.l.b16 %v564
        %v619 = vunpack.c.l.b16 %v565
        %v620 = vunpack.c.l.b16 %v566
        %v621 = vunpack.c.l.b16 %v567
        %v622 = vunpack.c.l.b16 %v568
        %v623 = vunpack.c.l.b16 %v569
        %v624 = vunpack.c.l.b16 %v570
        %v625 = vunpack.c.l.b16 %v571
        %v626 = vunpack.c.l.b16 %v572
        %v627 = vpack.c.b16 %v604, %v603
        %v628 = vpack.c.b16 %v606, %v605
        %v629 = vpack.c.b16 %v608, %v607
        %v630 = vpack.c.b16 %v610, %v609
        %v631 = vpack.c.b16 %v612, %v611
        %v632 = vpack.c.b16 %v614, %v613
        %v633 = vpack.c.b16 %v616, %v615
        %v634 = vpack.c.b16 %v618, %v617
        %v635 = vpack.c.b16 %v620, %v619
        %v636 = vpack.c.b16 %v622, %v621
        %v637 = vpack.c.b16 %v624, %v623
        %v638 = vpack.c.b16 %v626, %v625
        %vm651 = vcmask 523264
        %v652 = vsel %vm651, %v577, 0
        %654 = vmatpush.bf16.msra.mxu0 %v634
        %655 = vmatpush.bf16.msra.mxu0 %v633
        %656 = vmatpush.bf16.msra.mxu0 %v632
        %657 = vmatpush.bf16.msra.mxu0 %v631
        %658 = vmatpush.bf16.msra.mxu0 %v630
        %659 = vmatpush.bf16.msra.mxu0 %v629
        %660 = vmatpush.bf16.msra.mxu0 %v628
        %661 = vmatpush.bf16.msra.mxu0 %v627
        %662 = vmatmul.bf16.gmra.mxu0 %v576
        %v663 = vpop.f32.mrf.mxu0
        %v664 = vadd.f32 %v573, %v663
        %v665 = vpop.f32.mrf.mxu0
        %666 = vdwg.mxu0
        %667 = vmatpush.bf16.msra.mxu0 0
        %668 = vmatpush.bf16.msra.mxu0 0
        %669 = vmatpush.bf16.msra.mxu0 0
        %670 = vmatpush.bf16.msra.mxu0 0
        %671 = vmatpush.bf16.msra.mxu0 %v638
        %672 = vmatpush.bf16.msra.mxu0 %v637
        %673 = vmatpush.bf16.msra.mxu0 %v636
        %674 = vmatpush.bf16.msra.mxu0 %v635
        %675 = vmatmul.bf16.gmra.mxu0 %v652
        %v676 = vpop.f32.mrf.mxu0
        %v677 = vadd.f32 %v664, %v676
        %v678 = vpop.f32.mrf.mxu0
        %679 = vdwg.mxu0
        %v680 = vld [vmem:[%s3] sm:$0x1]
        %v681 = vld [vmem:[%s4] sm:$0x1]
        %vm682 = vcmask 519168
        %v683 = vsel %vm682, %v677, 0.0
        %684 = vadd.xlane.f32.xlu0 %v683
        %v685 = vpop.xlane.xlu0 %684
        %v686 = vrcp.pop 64.0
        %v687 = vmul.f32 64.0, %v686
        %v688 = vsub.f32 1.0, %v687
        %v689 = vmul.f32 %v686, %v688
        %v690 = vadd.f32 %v686, %v689
        %vm691 = vweird.f32 %v686
        %v692 = vsel %vm691, %v686, %v690
        %v693 = vmul.f32 %v685, %v692
        %v694 = vsub.f32 %v677, %v693
        %v695 = vmul.f32 %v694, %v694
        %v696 = vsel %vm682, %v695, 0.0
        %697 = vadd.xlane.f32.xlu0 %v696
        %v698 = vpop.xlane.xlu0 %697
        %v699 = vmul.f32 %v698, %v692
        %v700 = vadd.f32 %v699, 1e-06
        %v701 = vrsqrt.pop %v700
        %v702 = vmul.f32 %v701, %v700
        %v703 = vmul.f32 %v702, %v701
        %v704 = vmul.f32 0.5, %v703
        %v705 = vsub.f32 1.5, %v704
        %v706 = vmul.f32 %v701, %v705
        %vm707 = vweird.f32 %v700
        %vm708 = vweird.f32 %v701
        %vm709 = vmor %vm707, %vm708
        %v710 = vsel %vm709, %v701, %v706
        %v711 = vmul.f32 %v694, %v710
        %v713 = vperm.slane %v680, 0
        %v715 = vmul.f32 %v711, %v713
        %v717 = vperm.slane %v681, 0
        %v719 = vadd.f32 %v715, %v717
        %v720 = vpack.c.bf16 %v719, %v719
        %v721 = vld [vmem:[%s5] sm:$0xff]
        %v722 = vld [vmem:[%s5 + $0x8] sm:$0xff]
        %v723 = vld [vmem:[%s5 + $0x10] sm:$0xff]
        %v724 = vld [vmem:[%s5 + $0x18] sm:$0xff]
        %v725 = vld [vmem:[%s5 + $0x20] sm:$0xff]
        %v726 = vld [vmem:[%s5 + $0x28] sm:$0xff]
        %v727 = vld [vmem:[%s5 + $0x30] sm:$0xff]
        %v728 = vld [vmem:[%s5 + $0x38] sm:$0xff]
        %v729 = vld [vmem:[%s6] sm:$0x3]
        %v731 = vperm.slane %v729, 0
        %v732 = vperm.slane %v729, 1
        %v743 = vunpack.c.l.b16 %v721
        %v744 = vunpack.c.h.b16 %v721
        %v745 = vunpack.c.l.b16 %v722
        %v746 = vunpack.c.h.b16 %v722
        %v747 = vunpack.c.l.b16 %v723
        %v748 = vunpack.c.h.b16 %v723
        %v749 = vunpack.c.l.b16 %v724
        %v750 = vunpack.c.h.b16 %v724
        %v751 = vunpack.c.l.b16 %v725
        %v752 = vunpack.c.h.b16 %v725
        %v753 = vunpack.c.l.b16 %v726
        %v754 = vunpack.c.h.b16 %v726
        %v755 = vunpack.c.l.b16 %v727
        %v756 = vunpack.c.h.b16 %v727
        %v757 = vunpack.c.l.b16 %v728
        %v758 = vunpack.c.h.b16 %v728
        %v759 = vpack.c.b16 %v745, %v743
        %v760 = vpack.c.b16 %v746, %v744
        %v761 = vpack.c.b16 %v749, %v747
        %v762 = vpack.c.b16 %v750, %v748
        %v763 = vpack.c.b16 %v753, %v751
        %v764 = vpack.c.b16 %v754, %v752
        %v765 = vpack.c.b16 %v757, %v755
        %v766 = vpack.c.b16 %v758, %v756
        %v776 = vsel %vm651, %v720, 0
        %778 = vmatpush.bf16.msra.mxu0 0
        %779 = vmatpush.bf16.msra.mxu0 0
        %780 = vmatpush.bf16.msra.mxu0 0
        %781 = vmatpush.bf16.msra.mxu0 0
        %782 = vmatpush.bf16.msra.mxu0 %v765
        %783 = vmatpush.bf16.msra.mxu0 %v763
        %784 = vmatpush.bf16.msra.mxu0 %v761
        %785 = vmatpush.bf16.msra.mxu0 %v759
        %786 = vmatmul.bf16.gmra.mxu0 %v776
        %v787 = vpop.f32.mrf.mxu0
        %v788 = vadd.f32 %v731, %v787
        %v789 = vpop.f32.mrf.mxu0
        %790 = vdwg.mxu0
        %791 = vmatpush.bf16.msra.mxu0 0
        %792 = vmatpush.bf16.msra.mxu0 0
        %793 = vmatpush.bf16.msra.mxu0 0
        %794 = vmatpush.bf16.msra.mxu0 0
        %795 = vmatpush.bf16.msra.mxu0 %v766
        %796 = vmatpush.bf16.msra.mxu0 %v764
        %797 = vmatpush.bf16.msra.mxu0 %v762
        %798 = vmatpush.bf16.msra.mxu0 %v760
        %799 = vmatmul.bf16.gmra.mxu0 %v776
        %v800 = vpop.f32.mrf.mxu0
        %v801 = vadd.f32 %v732, %v800
        %v802 = vpop.f32.mrf.mxu0
        %803 = vdwg.mxu0
        %v804 = vld [vmem:[%s7] sm:$0xf]
        %v805 = vld [vmem:[%s7 + $0x4] sm:$0xf]
        %v806 = vld [vmem:[%s7 + $0x8] sm:$0xf]
        %v807 = vld [vmem:[%s7 + $0xc] sm:$0xf]
        %v808 = vld [vmem:[%s7 + $0x10] sm:$0xf]
        %v809 = vld [vmem:[%s7 + $0x14] sm:$0xf]
        %v810 = vld [vmem:[%s7 + $0x18] sm:$0xf]
        %v811 = vld [vmem:[%s7 + $0x1c] sm:$0xf]
        %v812 = vld [vmem:[%s8] sm:$0x1]
        %v814 = vperm.slane %v812, 0
        %v816 = vmul.f32 %v788, 0.25
        %v817 = vpack.c.bf16 %v816, %v816
        %v818 = vpack.c.bf16 %v788, %v788
        %820 = vrot.lane.b32.xlu0 %v818, 64
        %v821 = vpop.permute.xlu0 %820
        %vm822 = vcmask 130048
        %v824 = vsel %vm822, %v817, 0
        %v827 = vsel %vm822, %v821, 0
        %829 = vmatpush.bf16.xpose.msra.mxu0 0
        %830 = vmatpush.bf16.xpose.msra.mxu0 0
        %831 = vmatpush.bf16.xpose.msra.mxu0 0
        %832 = vmatpush.bf16.xpose.msra.mxu0 0
        %833 = vmatpush.bf16.xpose.msra.mxu0 0
        %834 = vmatpush.bf16.xpose.msra.mxu0 0
        %835 = vmatpush.bf16.xpose.msra.mxu0 0
        %836 = vmatpush.bf16.xpose.msra.mxu0 %v827
        %837 = vmatmul.bf16.gmra.mxu0 %v824
        %v838 = vpop.f32.mrf.mxu0
        %v839 = vadd.f32 0.0, %v838
        %v840 = vpop.f32.mrf.mxu0
        %841 = vdwg.mxu0
        %vm842 = vcmask 27648
        %v843 = vsel %vm842, %v839, -inf
        %844 = vmax.xlane.f32.xlu0 %v843
        %v845 = vpop.xlane.xlu0 %844
        %v846 = vsub.f32 %v839, %v845
        %v847 = vmul.f32 %v846, 1.442695
        %v848 = vpow.pop %v847
        %v849 = vsel %vm842, %v848, 0.0
        %850 = vadd.xlane.f32.xlu0 %v849
        %v851 = vpop.xlane.xlu0 %850
        %v852 = vrcp.pop %v851
        %v853 = vmul.f32 %v848, %v852
        %v854 = vpack.c.bf16 %v853, %v853
        %v855 = vpack.c.bf16 %v801, %v801
        %vm856 = vcmask 31744
        %v858 = vsel %vm856, %v854, 0
        %vm860 = vcmask 1041408
        %v862 = vsel %vm860, %v855, 0
        %864 = vmatpush.bf16.msra.mxu0 0
        %865 = vmatpush.bf16.msra.mxu0 0
        %866 = vmatpush.bf16.msra.mxu0 0
        %867 = vmatpush.bf16.msra.mxu0 0
        %868 = vmatpush.bf16.msra.mxu0 0
        %869 = vmatpush.bf16.msra.mxu0 0
        %870 = vmatpush.bf16.msra.mxu0 0
        %871 = vmatpush.bf16.msra.mxu0 %v862
        %872 = vmatmul.bf16.gmra.mxu0 %v858
        %v873 = vpop.f32.mrf.mxu0
        %v874 = vadd.f32 0.0, %v873
        %v875 = vpop.f32.mrf.mxu0
        %876 = vdwg.mxu0
        %v877 = vpack.c.bf16 %v874, %v874
        %v880 = vunpack.c.l.b16 %v804
        %v881 = vunpack.c.l.b16 %v805
        %v882 = vpack.c.b16 %v881, %v880
        %v885 = vsel %vm822, %v877, 0
        %887 = vmatpush.bf16.msra.mxu0 0
        %888 = vmatpush.bf16.msra.mxu0 0
        %889 = vmatpush.bf16.msra.mxu0 0
        %890 = vmatpush.bf16.msra.mxu0 0
        %891 = vmatpush.bf16.msra.mxu0 0
        %892 = vmatpush.bf16.msra.mxu0 0
        %893 = vmatpush.bf16.msra.mxu0 0
        %894 = vmatpush.bf16.msra.mxu0 %v882
        %895 = vmatmul.bf16.gmra.mxu0 %v885
        %v896 = vpop.f32.mrf.mxu0
        %v897 = vadd.f32 0.0, %v896
        %v898 = vpop.f32.mrf.mxu0
        %899 = vdwg.mxu0
        %v900 = vadd.f32 %v814, %v897
        %902 = vrot.lane.b32.xlu0 %v817, 112
        %v903 = vpop.permute.xlu0 %902
        %904 = vrot.lane.b32.xlu0 %v818, 48
        %v905 = vpop.permute.xlu0 %904
        %v907 = vsel %vm822, %v903, 0
        %v910 = vsel %vm822, %v905, 0
        %912 = vmatpush.bf16.xpose.msra.mxu0 0
        %913 = vmatpush.bf16.xpose.msra.mxu0 0
        %914 = vmatpush.bf16.xpose.msra.mxu0 0
        %915 = vmatpush.bf16.xpose.msra.mxu0 0
        %916 = vmatpush.bf16.xpose.msra.mxu0 0
        %917 = vmatpush.bf16.xpose.msra.mxu0 0
        %918 = vmatpush.bf16.xpose.msra.mxu0 0
        %919 = vmatpush.bf16.xpose.msra.mxu0 %v910
        %920 = vmatmul.bf16.gmra.mxu0 %v907
        %v921 = vpop.f32.mrf.mxu0
        %v922 = vadd.f32 0.0, %v921
        %v923 = vpop.f32.mrf.mxu0
        %924 = vdwg.mxu0
        %v925 = vsel %vm842, %v922, -inf
        %926 = vmax.xlane.f32.xlu0 %v925
        %v927 = vpop.xlane.xlu0 %926
        %v928 = vsub.f32 %v922, %v927
        %v929 = vmul.f32 %v928, 1.442695
        %v930 = vpow.pop %v929
        %v931 = vsel %vm842, %v930, 0.0
        %932 = vadd.xlane.f32.xlu0 %v931
        %v933 = vpop.xlane.xlu0 %932
        %v934 = vrcp.pop %v933
        %v935 = vmul.f32 %v930, %v934
        %v936 = vpack.c.bf16 %v935, %v935
        %938 = vrot.lane.b32.xlu0 %v855, 112
        %v939 = vpop.permute.xlu0 %938
        %v941 = vsel %vm856, %v936, 0
        %v944 = vsel %vm860, %v939, 0
        %946 = vmatpush.bf16.msra.mxu0 0
        %947 = vmatpush.bf16.msra.mxu0 0
        %948 = vmatpush.bf16.msra.mxu0 0
        %949 = vmatpush.bf16.msra.mxu0 0
        %950 = vmatpush.bf16.msra.mxu0 0
        %951 = vmatpush.bf16.msra.mxu0 0
        %952 = vmatpush.bf16.msra.mxu0 0
        %953 = vmatpush.bf16.msra.mxu0 %v944
        %954 = vmatmul.bf16.gmra.mxu0 %v941
        %v955 = vpop.f32.mrf.mxu0
        %v956 = vadd.f32 0.0, %v955
        %v957 = vpop.f32.mrf.mxu0
        %958 = vdwg.mxu0
        %v959 = vpack.c.bf16 %v956, %v956
        %v962 = vunpack.c.l.b16 %v806
        %v963 = vunpack.c.l.b16 %v807
        %v964 = vpack.c.b16 %v963, %v962
        %v967 = vsel %vm822, %v959, 0
        %969 = vmatpush.bf16.msra.mxu0 0
        %970 = vmatpush.bf16.msra.mxu0 0
        %971 = vmatpush.bf16.msra.mxu0 0
        %972 = vmatpush.bf16.msra.mxu0 0
        %973 = vmatpush.bf16.msra.mxu0 0
        %974 = vmatpush.bf16.msra.mxu0 0
        %975 = vmatpush.bf16.msra.mxu0 0
        %976 = vmatpush.bf16.msra.mxu0 %v964
        %977 = vmatmul.bf16.gmra.mxu0 %v967
        %v978 = vpop.f32.mrf.mxu0
        %v979 = vadd.f32 0.0, %v978
        %v980 = vpop.f32.mrf.mxu0
        %981 = vdwg.mxu0
        %v982 = vadd.f32 %v900, %v979
        %983 = vrot.lane.b32.xlu0 %v817, 96
        %v984 = vpop.permute.xlu0 %983
        %985 = vrot.lane.b32.xlu0 %v818, 32
        %v986 = vpop.permute.xlu0 %985
        %v988 = vsel %vm822, %v984, 0
        %v991 = vsel %vm822, %v986, 0
        %993 = vmatpush.bf16.xpose.msra.mxu0 0
        %994 = vmatpush.bf16.xpose.msra.mxu0 0
        %995 = vmatpush.bf16.xpose.msra.mxu0 0
        %996 = vmatpush.bf16.xpose.msra.mxu0 0
        %997 = vmatpush.bf16.xpose.msra.mxu0 0
        %998 = vmatpush.bf16.xpose.msra.mxu0 0
        %999 = vmatpush.bf16.xpose.msra.mxu0 0
        %1000 = vmatpush.bf16.xpose.msra.mxu0 %v991
        %1001 = vmatmul.bf16.gmra.mxu0 %v988
        %v1002 = vpop.f32.mrf.mxu0
        %v1003 = vadd.f32 0.0, %v1002
        %v1004 = vpop.f32.mrf.mxu0
        %1005 = vdwg.mxu0
        %v1006 = vsel %vm842, %v1003, -inf
        %1007 = vmax.xlane.f32.xlu0 %v1006
        %v1008 = vpop.xlane.xlu0 %1007
        %v1009 = vsub.f32 %v1003, %v1008
        %v1010 = vmul.f32 %v1009, 1.442695
        %v1011 = vpow.pop %v1010
        %v1012 = vsel %vm842, %v1011, 0.0
        %1013 = vadd.xlane.f32.xlu0 %v1012
        %v1014 = vpop.xlane.xlu0 %1013
        %v1015 = vrcp.pop %v1014
        %v1016 = vmul.f32 %v1011, %v1015
        %v1017 = vpack.c.bf16 %v1016, %v1016
        %1018 = vrot.lane.b32.xlu0 %v855, 96
        %v1019 = vpop.permute.xlu0 %1018
        %v1021 = vsel %vm856, %v1017, 0
        %v1024 = vsel %vm860, %v1019, 0
        %1026 = vmatpush.bf16.msra.mxu0 0
        %1027 = vmatpush.bf16.msra.mxu0 0
        %1028 = vmatpush.bf16.msra.mxu0 0
        %1029 = vmatpush.bf16.msra.mxu0 0
        %1030 = vmatpush.bf16.msra.mxu0 0
        %1031 = vmatpush.bf16.msra.mxu0 0
        %1032 = vmatpush.bf16.msra.mxu0 0
        %1033 = vmatpush.bf16.msra.mxu0 %v1024
        %1034 = vmatmul.bf16.gmra.mxu0 %v1021
        %v1035 = vpop.f32.mrf.mxu0
        %v1036 = vadd.f32 0.0, %v1035
        %v1037 = vpop.f32.mrf.mxu0
        %1038 = vdwg.mxu0
        %v1039 = vpack.c.bf16 %v1036, %v1036
        %v1042 = vunpack.c.l.b16 %v808
        %v1043 = vunpack.c.l.b16 %v809
        %v1044 = vpack.c.b16 %v1043, %v1042
        %v1047 = vsel %vm822, %v1039, 0
        %1049 = vmatpush.bf16.msra.mxu0 0
        %1050 = vmatpush.bf16.msra.mxu0 0
        %1051 = vmatpush.bf16.msra.mxu0 0
        %1052 = vmatpush.bf16.msra.mxu0 0
        %1053 = vmatpush.bf16.msra.mxu0 0
        %1054 = vmatpush.bf16.msra.mxu0 0
        %1055 = vmatpush.bf16.msra.mxu0 0
        %1056 = vmatpush.bf16.msra.mxu0 %v1044
        %1057 = vmatmul.bf16.gmra.mxu0 %v1047
        %v1058 = vpop.f32.mrf.mxu0
        %v1059 = vadd.f32 0.0, %v1058
        %v1060 = vpop.f32.mrf.mxu0
        %1061 = vdwg.mxu0
        %v1062 = vadd.f32 %v982, %v1059
        %1063 = vrot.lane.b32.xlu0 %v817, 80
        %v1064 = vpop.permute.xlu0 %1063
        %1065 = vrot.lane.b32.xlu0 %v818, 16
        %v1066 = vpop.permute.xlu0 %1065
        %v1068 = vsel %vm822, %v1064, 0
        %v1071 = vsel %vm822, %v1066, 0
        %1073 = vmatpush.bf16.xpose.msra.mxu0 0
        %1074 = vmatpush.bf16.xpose.msra.mxu0 0
        %1075 = vmatpush.bf16.xpose.msra.mxu0 0
        %1076 = vmatpush.bf16.xpose.msra.mxu0 0
        %1077 = vmatpush.bf16.xpose.msra.mxu0 0
        %1078 = vmatpush.bf16.xpose.msra.mxu0 0
        %1079 = vmatpush.bf16.xpose.msra.mxu0 0
        %1080 = vmatpush.bf16.xpose.msra.mxu0 %v1071
        %1081 = vmatmul.bf16.gmra.mxu0 %v1068
        %v1082 = vpop.f32.mrf.mxu0
        %v1083 = vadd.f32 0.0, %v1082
        %v1084 = vpop.f32.mrf.mxu0
        %1085 = vdwg.mxu0
        %v1086 = vsel %vm842, %v1083, -inf
        %1087 = vmax.xlane.f32.xlu0 %v1086
        %v1088 = vpop.xlane.xlu0 %1087
        %v1089 = vsub.f32 %v1083, %v1088
        %v1090 = vmul.f32 %v1089, 1.442695
        %v1091 = vpow.pop %v1090
        %v1092 = vsel %vm842, %v1091, 0.0
        %1093 = vadd.xlane.f32.xlu0 %v1092
        %v1094 = vpop.xlane.xlu0 %1093
        %v1095 = vrcp.pop %v1094
        %v1096 = vmul.f32 %v1091, %v1095
        %v1097 = vpack.c.bf16 %v1096, %v1096
        %1098 = vrot.lane.b32.xlu0 %v855, 80
        %v1099 = vpop.permute.xlu0 %1098
        %v1101 = vsel %vm856, %v1097, 0
        %v1104 = vsel %vm860, %v1099, 0
        %1106 = vmatpush.bf16.msra.mxu0 0
        %1107 = vmatpush.bf16.msra.mxu0 0
        %1108 = vmatpush.bf16.msra.mxu0 0
        %1109 = vmatpush.bf16.msra.mxu0 0
        %1110 = vmatpush.bf16.msra.mxu0 0
        %1111 = vmatpush.bf16.msra.mxu0 0
        %1112 = vmatpush.bf16.msra.mxu0 0
        %1113 = vmatpush.bf16.msra.mxu0 %v1104
        %1114 = vmatmul.bf16.gmra.mxu0 %v1101
        %v1115 = vpop.f32.mrf.mxu0
        %v1116 = vadd.f32 0.0, %v1115
        %v1117 = vpop.f32.mrf.mxu0
        %1118 = vdwg.mxu0
        %v1119 = vpack.c.bf16 %v1116, %v1116
        %v1122 = vunpack.c.l.b16 %v810
        %v1123 = vunpack.c.l.b16 %v811
        %v1124 = vpack.c.b16 %v1123, %v1122
        %v1127 = vsel %vm822, %v1119, 0
        %1129 = vmatpush.bf16.msra.mxu0 0
        %1130 = vmatpush.bf16.msra.mxu0 0
        %1131 = vmatpush.bf16.msra.mxu0 0
        %1132 = vmatpush.bf16.msra.mxu0 0
        %1133 = vmatpush.bf16.msra.mxu0 0
        %1134 = vmatpush.bf16.msra.mxu0 0
        %1135 = vmatpush.bf16.msra.mxu0 0
        %1136 = vmatpush.bf16.msra.mxu0 %v1124
        %1137 = vmatmul.bf16.gmra.mxu0 %v1127
        %v1138 = vpop.f32.mrf.mxu0
        %v1139 = vadd.f32 0.0, %v1138
        %v1140 = vpop.f32.mrf.mxu0
        %1141 = vdwg.mxu0
        %v1142 = vadd.f32 %v1062, %v1139
        %v1143 = vadd.f32 %v677, %v1142
        %v1144 = vld [vmem:[%s9] sm:$0x1]
        %v1145 = vld [vmem:[%s10] sm:$0x1]
        %v1146 = vsel %vm682, %v1143, 0.0
        %1147 = vadd.xlane.f32.xlu0 %v1146
        %v1148 = vpop.xlane.xlu0 %1147
        %v1149 = vmul.f32 %v1148, %v692
        %v1150 = vsub.f32 %v1143, %v1149
        %v1151 = vmul.f32 %v1150, %v1150
        %v1152 = vsel %vm682, %v1151, 0.0
        %1153 = vadd.xlane.f32.xlu0 %v1152
        %v1154 = vpop.xlane.xlu0 %1153
        %v1155 = vmul.f32 %v1154, %v692
        %v1156 = vadd.f32 %v1155, 1e-06
        %v1157 = vrsqrt.pop %v1156
        %v1158 = vmul.f32 %v1157, %v1156
        %v1159 = vmul.f32 %v1158, %v1157
        %v1160 = vmul.f32 0.5, %v1159
        %v1161 = vsub.f32 1.5, %v1160
        %v1162 = vmul.f32 %v1157, %v1161
        %vm1163 = vweird.f32 %v1156
        %vm1164 = vweird.f32 %v1157
        %vm1165 = vmor %vm1163, %vm1164
        %v1166 = vsel %vm1165, %v1157, %v1162
        %v1167 = vmul.f32 %v1150, %v1166
        %v1169 = vperm.slane %v1144, 0
        %v1171 = vmul.f32 %v1167, %v1169
        %v1173 = vperm.slane %v1145, 0
        %v1175 = vadd.f32 %v1171, %v1173
        %v1176 = vpack.c.bf16 %v1175, %v1175
        %v1177 = vld [vmem:[%s11] sm:$0xf]
        %v1178 = vld [vmem:[%s11 + $0x4] sm:$0xf]
        %v1179 = vld [vmem:[%s11 + $0x8] sm:$0xf]
        %v1180 = vld [vmem:[%s11 + $0xc] sm:$0xf]
        %v1181 = vld [vmem:[%s11 + $0x10] sm:$0xf]
        %v1182 = vld [vmem:[%s11 + $0x14] sm:$0xf]
        %v1183 = vld [vmem:[%s11 + $0x18] sm:$0xf]
        %v1184 = vld [vmem:[%s11 + $0x1c] sm:$0xf]
        %v1185 = vld [vmem:[%s12] sm:$0x1]
        %v1187 = vperm.slane %v1185, 0
        %v1197 = vunpack.c.l.b16 %v1177
        %v1198 = vunpack.c.l.b16 %v1178
        %v1199 = vunpack.c.l.b16 %v1179
        %v1200 = vunpack.c.l.b16 %v1180
        %v1201 = vunpack.c.l.b16 %v1181
        %v1202 = vunpack.c.l.b16 %v1182
        %v1203 = vunpack.c.l.b16 %v1183
        %v1204 = vunpack.c.l.b16 %v1184
        %v1205 = vpack.c.b16 %v1198, %v1197
        %v1206 = vpack.c.b16 %v1200, %v1199
        %v1207 = vpack.c.b16 %v1202, %v1201
        %v1208 = vpack.c.b16 %v1204, %v1203
        %v1214 = vsel %vm651, %v1176, 0
        %1216 = vmatpush.bf16.msra.mxu0 0
        %1217 = vmatpush.bf16.msra.mxu0 0
        %1218 = vmatpush.bf16.msra.mxu0 0
        %1219 = vmatpush.bf16.msra.mxu0 0
        %1220 = vmatpush.bf16.msra.mxu0 %v1208
        %1221 = vmatpush.bf16.msra.mxu0 %v1207
        %1222 = vmatpush.bf16.msra.mxu0 %v1206
        %1223 = vmatpush.bf16.msra.mxu0 %v1205
        %1224 = vmatmul.bf16.gmra.mxu0 %v1214
        %v1225 = vpop.f32.mrf.mxu0
        %v1226 = vadd.f32 %v1187, %v1225
        %v1227 = vpop.f32.mrf.mxu0
        %1228 = vdwg.mxu0
        %v1229 = vmul.f32 %v1226, %v1226
        %v1230 = vmul.f32 %v1226, %v1229
        %v1231 = vmul.f32 %v1230, 0.044715
        %v1232 = vadd.f32 %v1226, %v1231
        %v1233 = vmul.f32 %v1232, 0.7978846
        %v1234 = vtanh.pop %v1233
        %v1235 = vadd.f32 %v1234, 1.0
        %v1236 = vmul.f32 %v1235, 0.5
        %v1237 = vmul.f32 %v1226, %v1236
        %v1238 = vpack.c.bf16 %v1237, %v1237
        %v1239 = vld [vmem:[%s13] sm:$0xf]
        %v1240 = vld [vmem:[%s13 + $0x4] sm:$0xf]
        %v1241 = vld [vmem:[%s13 + $0x8] sm:$0xf]
        %v1242 = vld [vmem:[%s13 + $0xc] sm:$0xf]
        %v1243 = vld [vmem:[%s13 + $0x10] sm:$0xf]
        %v1244 = vld [vmem:[%s13 + $0x14] sm:$0xf]
        %v1245 = vld [vmem:[%s13 + $0x18] sm:$0xf]
        %v1246 = vld [vmem:[%s13 + $0x1c] sm:$0xf]
        %v1247 = vld [vmem:[%s13 + $0x20] sm:$0xf]
        %v1248 = vld [vmem:[%s13 + $0x24] sm:$0xf]
        %v1249 = vld [vmem:[%s13 + $0x28] sm:$0xf]
        %v1250 = vld [vmem:[%s13 + $0x2c] sm:$0xf]
        %v1251 = vld [vmem:[%s13 + $0x30] sm:$0xf]
        %v1252 = vld [vmem:[%s13 + $0x34] sm:$0xf]
        %v1253 = vld [vmem:[%s13 + $0x38] sm:$0xf]
        %v1254 = vld [vmem:[%s13 + $0x3c] sm:$0xf]
        %v1255 = vld [vmem:[%s14] sm:$0x1]
        %v1257 = vperm.slane %v1255, 0
        %v1275 = vunpack.c.l.b16 %v1239
        %v1276 = vunpack.c.l.b16 %v1240
        %v1277 = vunpack.c.l.b16 %v1241
        %v1278 = vunpack.c.l.b16 %v1242
        %v1279 = vunpack.c.l.b16 %v1243
        %v1280 = vunpack.c.l.b16 %v1244
        %v1281 = vunpack.c.l.b16 %v1245
        %v1282 = vunpack.c.l.b16 %v1246
        %v1283 = vunpack.c.l.b16 %v1247
        %v1284 = vunpack.c.l.b16 %v1248
        %v1285 = vunpack.c.l.b16 %v1249
        %v1286 = vunpack.c.l.b16 %v1250
        %v1287 = vunpack.c.l.b16 %v1251
        %v1288 = vunpack.c.l.b16 %v1252
        %v1289 = vunpack.c.l.b16 %v1253
        %v1290 = vunpack.c.l.b16 %v1254
        %v1291 = vpack.c.b16 %v1276, %v1275
        %v1292 = vpack.c.b16 %v1278, %v1277
        %v1293 = vpack.c.b16 %v1280, %v1279
        %v1294 = vpack.c.b16 %v1282, %v1281
        %v1295 = vpack.c.b16 %v1284, %v1283
        %v1296 = vpack.c.b16 %v1286, %v1285
        %v1297 = vpack.c.b16 %v1288, %v1287
        %v1298 = vpack.c.b16 %v1290, %v1289
        %1307 = vmatpush.bf16.msra.mxu0 %v1298
        %1308 = vmatpush.bf16.msra.mxu0 %v1297
        %1309 = vmatpush.bf16.msra.mxu0 %v1296
        %1310 = vmatpush.bf16.msra.mxu0 %v1295
        %1311 = vmatpush.bf16.msra.mxu0 %v1294
        %1312 = vmatpush.bf16.msra.mxu0 %v1293
        %1313 = vmatpush.bf16.msra.mxu0 %v1292
        %1314 = vmatpush.bf16.msra.mxu0 %v1291
        %1315 = vmatmul.bf16.gmra.mxu0 %v1238
        %v1316 = vpop.f32.mrf.mxu0
        %v1317 = vadd.f32 %v1257, %v1316
        %v1318 = vpop.f32.mrf.mxu0
        %1319 = vdwg.mxu0
        %v1320 = vadd.f32 %v1143, %v1317
        %s1321 = scalar_lea.vmem %s3, 1
        %v1322 = vld [vmem:[%s1321] sm:$0x1]
        %s1323 = scalar_lea.vmem %s4, 1
        %v1324 = vld [vmem:[%s1323] sm:$0x1]
        %v1325 = vsel %vm682, %v1320, 0.0
        %1326 = vadd.xlane.f32.xlu0 %v1325
        %v1327 = vpop.xlane.xlu0 %1326
        %v1328 = vmul.f32 %v1327, %v692
        %v1329 = vsub.f32 %v1320, %v1328
        %v1330 = vmul.f32 %v1329, %v1329
        %v1331 = vsel %vm682, %v1330, 0.0
        %1332 = vadd.xlane.f32.xlu0 %v1331
        %v1333 = vpop.xlane.xlu0 %1332
        %v1334 = vmul.f32 %v1333, %v692
        %v1335 = vadd.f32 %v1334, 1e-06
        %v1336 = vrsqrt.pop %v1335
        %v1337 = vmul.f32 %v1336, %v1335
        %v1338 = vmul.f32 %v1337, %v1336
        %v1339 = vmul.f32 0.5, %v1338
        %v1340 = vsub.f32 1.5, %v1339
        %v1341 = vmul.f32 %v1336, %v1340
        %vm1342 = vweird.f32 %v1335
        %vm1343 = vweird.f32 %v1336
        %vm1344 = vmor %vm1342, %vm1343
        %v1345 = vsel %vm1344, %v1336, %v1341
        %v1346 = vmul.f32 %v1329, %v1345
        %v1348 = vperm.slane %v1322, 0
        %v1350 = vmul.f32 %v1346, %v1348
        %v1352 = vperm.slane %v1324, 0
        %v1354 = vadd.f32 %v1350, %v1352
        %v1355 = vpack.c.bf16 %v1354, %v1354
        %s1356 = scalar_lea.vmem %s5, 64
        %v1357 = vld [vmem:[%s1356] sm:$0xff]
        %v1358 = vld [vmem:[%s1356 + $0x8] sm:$0xff]
        %v1359 = vld [vmem:[%s1356 + $0x10] sm:$0xff]
        %v1360 = vld [vmem:[%s1356 + $0x18] sm:$0xff]
        %v1361 = vld [vmem:[%s1356 + $0x20] sm:$0xff]
        %v1362 = vld [vmem:[%s1356 + $0x28] sm:$0xff]
        %v1363 = vld [vmem:[%s1356 + $0x30] sm:$0xff]
        %v1364 = vld [vmem:[%s1356 + $0x38] sm:$0xff]
        %s1365 = scalar_lea.vmem %s6, 2
        %v1366 = vld [vmem:[%s1365] sm:$0x3]
        %v1368 = vperm.slane %v1366, 0
        %v1369 = vperm.slane %v1366, 1
        %v1380 = vunpack.c.l.b16 %v1357
        %v1381 = vunpack.c.h.b16 %v1357
        %v1382 = vunpack.c.l.b16 %v1358
        %v1383 = vunpack.c.h.b16 %v1358
        %v1384 = vunpack.c.l.b16 %v1359
        %v1385 = vunpack.c.h.b16 %v1359
        %v1386 = vunpack.c.l.b16 %v1360
        %v1387 = vunpack.c.h.b16 %v1360
        %v1388 = vunpack.c.l.b16 %v1361
        %v1389 = vunpack.c.h.b16 %v1361
        %v1390 = vunpack.c.l.b16 %v1362
        %v1391 = vunpack.c.h.b16 %v1362
        %v1392 = vunpack.c.l.b16 %v1363
        %v1393 = vunpack.c.h.b16 %v1363
        %v1394 = vunpack.c.l.b16 %v1364
        %v1395 = vunpack.c.h.b16 %v1364
        %v1396 = vpack.c.b16 %v1382, %v1380
        %v1397 = vpack.c.b16 %v1383, %v1381
        %v1398 = vpack.c.b16 %v1386, %v1384
        %v1399 = vpack.c.b16 %v1387, %v1385
        %v1400 = vpack.c.b16 %v1390, %v1388
        %v1401 = vpack.c.b16 %v1391, %v1389
        %v1402 = vpack.c.b16 %v1394, %v1392
        %v1403 = vpack.c.b16 %v1395, %v1393
        %v1413 = vsel %vm651, %v1355, 0
        %1415 = vmatpush.bf16.msra.mxu0 0
        %1416 = vmatpush.bf16.msra.mxu0 0
        %1417 = vmatpush.bf16.msra.mxu0 0
        %1418 = vmatpush.bf16.msra.mxu0 0
        %1419 = vmatpush.bf16.msra.mxu0 %v1402
        %1420 = vmatpush.bf16.msra.mxu0 %v1400
        %1421 = vmatpush.bf16.msra.mxu0 %v1398
        %1422 = vmatpush.bf16.msra.mxu0 %v1396
        %1423 = vmatmul.bf16.gmra.mxu0 %v1413
        %v1424 = vpop.f32.mrf.mxu0
        %v1425 = vadd.f32 %v1368, %v1424
        %v1426 = vpop.f32.mrf.mxu0
        %1427 = vdwg.mxu0
        %1428 = vmatpush.bf16.msra.mxu0 0
        %1429 = vmatpush.bf16.msra.mxu0 0
        %1430 = vmatpush.bf16.msra.mxu0 0
        %1431 = vmatpush.bf16.msra.mxu0 0
        %1432 = vmatpush.bf16.msra.mxu0 %v1403
        %1433 = vmatpush.bf16.msra.mxu0 %v1401
        %1434 = vmatpush.bf16.msra.mxu0 %v1399
        %1435 = vmatpush.bf16.msra.mxu0 %v1397
        %1436 = vmatmul.bf16.gmra.mxu0 %v1413
        %v1437 = vpop.f32.mrf.mxu0
        %v1438 = vadd.f32 %v1369, %v1437
        %v1439 = vpop.f32.mrf.mxu0
        %1440 = vdwg.mxu0
        %s1441 = scalar_lea.vmem %s7, 32
        %v1442 = vld [vmem:[%s1441] sm:$0xf]
        %v1443 = vld [vmem:[%s1441 + $0x4] sm:$0xf]
        %v1444 = vld [vmem:[%s1441 + $0x8] sm:$0xf]
        %v1445 = vld [vmem:[%s1441 + $0xc] sm:$0xf]
        %v1446 = vld [vmem:[%s1441 + $0x10] sm:$0xf]
        %v1447 = vld [vmem:[%s1441 + $0x14] sm:$0xf]
        %v1448 = vld [vmem:[%s1441 + $0x18] sm:$0xf]
        %v1449 = vld [vmem:[%s1441 + $0x1c] sm:$0xf]
        %s1450 = scalar_lea.vmem %s8, 1
        %v1451 = vld [vmem:[%s1450] sm:$0x1]
        %v1453 = vperm.slane %v1451, 0
        %v1455 = vmul.f32 %v1425, 0.25
        %v1456 = vpack.c.bf16 %v1455, %v1455
        %v1457 = vpack.c.bf16 %v1425, %v1425
        %1459 = vrot.lane.b32.xlu0 %v1457, 64
        %v1460 = vpop.permute.xlu0 %1459
        %v1462 = vsel %vm822, %v1456, 0
        %v1465 = vsel %vm822, %v1460, 0
        %1467 = vmatpush.bf16.xpose.msra.mxu0 0
        %1468 = vmatpush.bf16.xpose.msra.mxu0 0
        %1469 = vmatpush.bf16.xpose.msra.mxu0 0
        %1470 = vmatpush.bf16.xpose.msra.mxu0 0
        %1471 = vmatpush.bf16.xpose.msra.mxu0 0
        %1472 = vmatpush.bf16.xpose.msra.mxu0 0
        %1473 = vmatpush.bf16.xpose.msra.mxu0 0
        %1474 = vmatpush.bf16.xpose.msra.mxu0 %v1465
        %1475 = vmatmul.bf16.gmra.mxu0 %v1462
        %v1476 = vpop.f32.mrf.mxu0
        %v1477 = vadd.f32 0.0, %v1476
        %v1478 = vpop.f32.mrf.mxu0
        %1479 = vdwg.mxu0
        %v1480 = vsel %vm842, %v1477, -inf
        %1481 = vmax.xlane.f32.xlu0 %v1480
        %v1482 = vpop.xlane.xlu0 %1481
        %v1483 = vsub.f32 %v1477, %v1482
        %v1484 = vmul.f32 %v1483, 1.442695
        %v1485 = vpow.pop %v1484
        %v1486 = vsel %vm842, %v1485, 0.0
        %1487 = vadd.xlane.f32.xlu0 %v1486
        %v1488 = vpop.xlane.xlu0 %1487
        %v1489 = vrcp.pop %v1488
        %v1490 = vmul.f32 %v1485, %v1489
        %v1491 = vpack.c.bf16 %v1490, %v1490
        %v1492 = vpack.c.bf16 %v1438, %v1438
        %v1494 = vsel %vm856, %v1491, 0
        %v1497 = vsel %vm860, %v1492, 0
        %1499 = vmatpush.bf16.msra.mxu0 0
        %1500 = vmatpush.bf16.msra.mxu0 0
        %1501 = vmatpush.bf16.msra.mxu0 0
        %1502 = vmatpush.bf16.msra.mxu0 0
        %1503 = vmatpush.bf16.msra.mxu0 0
        %1504 = vmatpush.bf16.msra.mxu0 0
        %1505 = vmatpush.bf16.msra.mxu0 0
        %1506 = vmatpush.bf16.msra.mxu0 %v1497
        %1507 = vmatmul.bf16.gmra.mxu0 %v1494
        %v1508 = vpop.f32.mrf.mxu0
        %v1509 = vadd.f32 0.0, %v1508
        %v1510 = vpop.f32.mrf.mxu0
        %1511 = vdwg.mxu0
        %v1512 = vpack.c.bf16 %v1509, %v1509
        %v1515 = vunpack.c.l.b16 %v1442
        %v1516 = vunpack.c.l.b16 %v1443
        %v1517 = vpack.c.b16 %v1516, %v1515
        %v1520 = vsel %vm822, %v1512, 0
        %1522 = vmatpush.bf16.msra.mxu0 0
        %1523 = vmatpush.bf16.msra.mxu0 0
        %1524 = vmatpush.bf16.msra.mxu0 0
        %1525 = vmatpush.bf16.msra.mxu0 0
        %1526 = vmatpush.bf16.msra.mxu0 0
        %1527 = vmatpush.bf16.msra.mxu0 0
        %1528 = vmatpush.bf16.msra.mxu0 0
        %1529 = vmatpush.bf16.msra.mxu0 %v1517
        %1530 = vmatmul.bf16.gmra.mxu0 %v1520
        %v1531 = vpop.f32.mrf.mxu0
        %v1532 = vadd.f32 0.0, %v1531
        %v1533 = vpop.f32.mrf.mxu0
        %1534 = vdwg.mxu0
        %v1535 = vadd.f32 %v1453, %v1532
        %1537 = vrot.lane.b32.xlu0 %v1456, 112
        %v1538 = vpop.permute.xlu0 %1537
        %1539 = vrot.lane.b32.xlu0 %v1457, 48
        %v1540 = vpop.permute.xlu0 %1539
        %v1542 = vsel %vm822, %v1538, 0
        %v1545 = vsel %vm822, %v1540, 0
        %1547 = vmatpush.bf16.xpose.msra.mxu0 0
        %1548 = vmatpush.bf16.xpose.msra.mxu0 0
        %1549 = vmatpush.bf16.xpose.msra.mxu0 0
        %1550 = vmatpush.bf16.xpose.msra.mxu0 0
        %1551 = vmatpush.bf16.xpose.msra.mxu0 0
        %1552 = vmatpush.bf16.xpose.msra.mxu0 0
        %1553 = vmatpush.bf16.xpose.msra.mxu0 0
        %1554 = vmatpush.bf16.xpose.msra.mxu0 %v1545
        %1555 = vmatmul.bf16.gmra.mxu0 %v1542
        %v1556 = vpop.f32.mrf.mxu0
        %v1557 = vadd.f32 0.0, %v1556
        %v1558 = vpop.f32.mrf.mxu0
        %1559 = vdwg.mxu0
        %v1560 = vsel %vm842, %v1557, -inf
        %1561 = vmax.xlane.f32.xlu0 %v1560
        %v1562 = vpop.xlane.xlu0 %1561
        %v1563 = vsub.f32 %v1557, %v1562
        %v1564 = vmul.f32 %v1563, 1.442695
        %v1565 = vpow.pop %v1564
        %v1566 = vsel %vm842, %v1565, 0.0
        %1567 = vadd.xlane.f32.xlu0 %v1566
        %v1568 = vpop.xlane.xlu0 %1567
        %v1569 = vrcp.pop %v1568
        %v1570 = vmul.f32 %v1565, %v1569
        %v1571 = vpack.c.bf16 %v1570, %v1570
        %1573 = vrot.lane.b32.xlu0 %v1492, 112
        %v1574 = vpop.permute.xlu0 %1573
        %v1576 = vsel %vm856, %v1571, 0
        %v1579 = vsel %vm860, %v1574, 0
        %1581 = vmatpush.bf16.msra.mxu0 0
        %1582 = vmatpush.bf16.msra.mxu0 0
        %1583 = vmatpush.bf16.msra.mxu0 0
        %1584 = vmatpush.bf16.msra.mxu0 0
        %1585 = vmatpush.bf16.msra.mxu0 0
        %1586 = vmatpush.bf16.msra.mxu0 0
        %1587 = vmatpush.bf16.msra.mxu0 0
        %1588 = vmatpush.bf16.msra.mxu0 %v1579
        %1589 = vmatmul.bf16.gmra.mxu0 %v1576
        %v1590 = vpop.f32.mrf.mxu0
        %v1591 = vadd.f32 0.0, %v1590
        %v1592 = vpop.f32.mrf.mxu0
        %1593 = vdwg.mxu0
        %v1594 = vpack.c.bf16 %v1591, %v1591
        %v1597 = vunpack.c.l.b16 %v1444
        %v1598 = vunpack.c.l.b16 %v1445
        %v1599 = vpack.c.b16 %v1598, %v1597
        %v1602 = vsel %vm822, %v1594, 0
        %1604 = vmatpush.bf16.msra.mxu0 0
        %1605 = vmatpush.bf16.msra.mxu0 0
        %1606 = vmatpush.bf16.msra.mxu0 0
        %1607 = vmatpush.bf16.msra.mxu0 0
        %1608 = vmatpush.bf16.msra.mxu0 0
        %1609 = vmatpush.bf16.msra.mxu0 0
        %1610 = vmatpush.bf16.msra.mxu0 0
        %1611 = vmatpush.bf16.msra.mxu0 %v1599
        %1612 = vmatmul.bf16.gmra.mxu0 %v1602
        %v1613 = vpop.f32.mrf.mxu0
        %v1614 = vadd.f32 0.0, %v1613
        %v1615 = vpop.f32.mrf.mxu0
        %1616 = vdwg.mxu0
        %v1617 = vadd.f32 %v1535, %v1614
        %1618 = vrot.lane.b32.xlu0 %v1456, 96
        %v1619 = vpop.permute.xlu0 %1618
        %1620 = vrot.lane.b32.xlu0 %v1457, 32
        %v1621 = vpop.permute.xlu0 %1620
        %v1623 = vsel %vm822, %v1619, 0
        %v1626 = vsel %vm822, %v1621, 0
        %1628 = vmatpush.bf16.xpose.msra.mxu0 0
        %1629 = vmatpush.bf16.xpose.msra.mxu0 0
        %1630 = vmatpush.bf16.xpose.msra.mxu0 0
        %1631 = vmatpush.bf16.xpose.msra.mxu0 0
        %1632 = vmatpush.bf16.xpose.msra.mxu0 0
        %1633 = vmatpush.bf16.xpose.msra.mxu0 0
        %1634 = vmatpush.bf16.xpose.msra.mxu0 0
        %1635 = vmatpush.bf16.xpose.msra.mxu0 %v1626
        %1636 = vmatmul.bf16.gmra.mxu0 %v1623
        %v1637 = vpop.f32.mrf.mxu0
        %v1638 = vadd.f32 0.0, %v1637
        %v1639 = vpop.f32.mrf.mxu0
        %1640 = vdwg.mxu0
        %v1641 = vsel %vm842, %v1638, -inf
        %1642 = vmax.xlane.f32.xlu0 %v1641
        %v1643 = vpop.xlane.xlu0 %1642
        %v1644 = vsub.f32 %v1638, %v1643
        %v1645 = vmul.f32 %v1644, 1.442695
        %v1646 = vpow.pop %v1645
        %v1647 = vsel %vm842, %v1646, 0.0
        %1648 = vadd.xlane.f32.xlu0 %v1647
        %v1649 = vpop.xlane.xlu0 %1648
        %v1650 = vrcp.pop %v1649
        %v1651 = vmul.f32 %v1646, %v1650
        %v1652 = vpack.c.bf16 %v1651, %v1651
        %1653 = vrot.lane.b32.xlu0 %v1492, 96
        %v1654 = vpop.permute.xlu0 %1653
        %v1656 = vsel %vm856, %v1652, 0
        %v1659 = vsel %vm860, %v1654, 0
        %1661 = vmatpush.bf16.msra.mxu0 0
        %1662 = vmatpush.bf16.msra.mxu0 0
        %1663 = vmatpush.bf16.msra.mxu0 0
        %1664 = vmatpush.bf16.msra.mxu0 0
        %1665 = vmatpush.bf16.msra.mxu0 0
        %1666 = vmatpush.bf16.msra.mxu0 0
        %1667 = vmatpush.bf16.msra.mxu0 0
        %1668 = vmatpush.bf16.msra.mxu0 %v1659
        %1669 = vmatmul.bf16.gmra.mxu0 %v1656
        %v1670 = vpop.f32.mrf.mxu0
        %v1671 = vadd.f32 0.0, %v1670
        %v1672 = vpop.f32.mrf.mxu0
        %1673 = vdwg.mxu0
        %v1674 = vpack.c.bf16 %v1671, %v1671
        %v1677 = vunpack.c.l.b16 %v1446
        %v1678 = vunpack.c.l.b16 %v1447
        %v1679 = vpack.c.b16 %v1678, %v1677
        %v1682 = vsel %vm822, %v1674, 0
        %1684 = vmatpush.bf16.msra.mxu0 0
        %1685 = vmatpush.bf16.msra.mxu0 0
        %1686 = vmatpush.bf16.msra.mxu0 0
        %1687 = vmatpush.bf16.msra.mxu0 0
        %1688 = vmatpush.bf16.msra.mxu0 0
        %1689 = vmatpush.bf16.msra.mxu0 0
        %1690 = vmatpush.bf16.msra.mxu0 0
        %1691 = vmatpush.bf16.msra.mxu0 %v1679
        %1692 = vmatmul.bf16.gmra.mxu0 %v1682
        %v1693 = vpop.f32.mrf.mxu0
        %v1694 = vadd.f32 0.0, %v1693
        %v1695 = vpop.f32.mrf.mxu0
        %1696 = vdwg.mxu0
        %v1697 = vadd.f32 %v1617, %v1694
        %1698 = vrot.lane.b32.xlu0 %v1456, 80
        %v1699 = vpop.permute.xlu0 %1698
        %1700 = vrot.lane.b32.xlu0 %v1457, 16
        %v1701 = vpop.permute.xlu0 %1700
        %v1703 = vsel %vm822, %v1699, 0
        %v1706 = vsel %vm822, %v1701, 0
        %1708 = vmatpush.bf16.xpose.msra.mxu0 0
        %1709 = vmatpush.bf16.xpose.msra.mxu0 0
        %1710 = vmatpush.bf16.xpose.msra.mxu0 0
        %1711 = vmatpush.bf16.xpose.msra.mxu0 0
        %1712 = vmatpush.bf16.xpose.msra.mxu0 0
        %1713 = vmatpush.bf16.xpose.msra.mxu0 0
        %1714 = vmatpush.bf16.xpose.msra.mxu0 0
        %1715 = vmatpush.bf16.xpose.msra.mxu0 %v1706
        %1716 = vmatmul.bf16.gmra.mxu0 %v1703
        %v1717 = vpop.f32.mrf.mxu0
        %v1718 = vadd.f32 0.0, %v1717
        %v1719 = vpop.f32.mrf.mxu0
        %1720 = vdwg.mxu0
        %v1721 = vsel %vm842, %v1718, -inf
        %1722 = vmax.xlane.f32.xlu0 %v1721
        %v1723 = vpop.xlane.xlu0 %1722
        %v1724 = vsub.f32 %v1718, %v1723
        %v1725 = vmul.f32 %v1724, 1.442695
        %v1726 = vpow.pop %v1725
        %v1727 = vsel %vm842, %v1726, 0.0
        %1728 = vadd.xlane.f32.xlu0 %v1727
        %v1729 = vpop.xlane.xlu0 %1728
        %v1730 = vrcp.pop %v1729
        %v1731 = vmul.f32 %v1726, %v1730
        %v1732 = vpack.c.bf16 %v1731, %v1731
        %1733 = vrot.lane.b32.xlu0 %v1492, 80
        %v1734 = vpop.permute.xlu0 %1733
        %v1736 = vsel %vm856, %v1732, 0
        %v1739 = vsel %vm860, %v1734, 0
        %1741 = vmatpush.bf16.msra.mxu0 0
        %1742 = vmatpush.bf16.msra.mxu0 0
        %1743 = vmatpush.bf16.msra.mxu0 0
        %1744 = vmatpush.bf16.msra.mxu0 0
        %1745 = vmatpush.bf16.msra.mxu0 0
        %1746 = vmatpush.bf16.msra.mxu0 0
        %1747 = vmatpush.bf16.msra.mxu0 0
        %1748 = vmatpush.bf16.msra.mxu0 %v1739
        %1749 = vmatmul.bf16.gmra.mxu0 %v1736
        %v1750 = vpop.f32.mrf.mxu0
        %v1751 = vadd.f32 0.0, %v1750
        %v1752 = vpop.f32.mrf.mxu0
        %1753 = vdwg.mxu0
        %v1754 = vpack.c.bf16 %v1751, %v1751
        %v1757 = vunpack.c.l.b16 %v1448
        %v1758 = vunpack.c.l.b16 %v1449
        %v1759 = vpack.c.b16 %v1758, %v1757
        %v1762 = vsel %vm822, %v1754, 0
        %1764 = vmatpush.bf16.msra.mxu0 0
        %1765 = vmatpush.bf16.msra.mxu0 0
        %1766 = vmatpush.bf16.msra.mxu0 0
        %1767 = vmatpush.bf16.msra.mxu0 0
        %1768 = vmatpush.bf16.msra.mxu0 0
        %1769 = vmatpush.bf16.msra.mxu0 0
        %1770 = vmatpush.bf16.msra.mxu0 0
        %1771 = vmatpush.bf16.msra.mxu0 %v1759
        %1772 = vmatmul.bf16.gmra.mxu0 %v1762
        %v1773 = vpop.f32.mrf.mxu0
        %v1774 = vadd.f32 0.0, %v1773
        %v1775 = vpop.f32.mrf.mxu0
        %1776 = vdwg.mxu0
        %v1777 = vadd.f32 %v1697, %v1774
        %v1778 = vadd.f32 %v1320, %v1777
        %s1779 = scalar_lea.vmem %s9, 1
        %v1780 = vld [vmem:[%s1779] sm:$0x1]
        %s1781 = scalar_lea.vmem %s10, 1
        %v1782 = vld [vmem:[%s1781] sm:$0x1]
        %v1783 = vsel %vm682, %v1778, 0.0
        %1784 = vadd.xlane.f32.xlu0 %v1783
        %v1785 = vpop.xlane.xlu0 %1784
        %v1786 = vmul.f32 %v1785, %v692
        %v1787 = vsub.f32 %v1778, %v1786
        %v1788 = vmul.f32 %v1787, %v1787
        %v1789 = vsel %vm682, %v1788, 0.0
        %1790 = vadd.xlane.f32.xlu0 %v1789
        %v1791 = vpop.xlane.xlu0 %1790
        %v1792 = vmul.f32 %v1791, %v692
        %v1793 = vadd.f32 %v1792, 1e-06
        %v1794 = vrsqrt.pop %v1793
        %v1795 = vmul.f32 %v1794, %v1793
        %v1796 = vmul.f32 %v1795, %v1794
        %v1797 = vmul.f32 0.5, %v1796
        %v1798 = vsub.f32 1.5, %v1797
        %v1799 = vmul.f32 %v1794, %v1798
        %vm1800 = vweird.f32 %v1793
        %vm1801 = vweird.f32 %v1794
        %vm1802 = vmor %vm1800, %vm1801
        %v1803 = vsel %vm1802, %v1794, %v1799
        %v1804 = vmul.f32 %v1787, %v1803
        %v1806 = vperm.slane %v1780, 0
        %v1808 = vmul.f32 %v1804, %v1806
        %v1810 = vperm.slane %v1782, 0
        %v1812 = vadd.f32 %v1808, %v1810
        %v1813 = vpack.c.bf16 %v1812, %v1812
        %s1814 = scalar_lea.vmem %s11, 32
        %v1815 = vld [vmem:[%s1814] sm:$0xf]
        %v1816 = vld [vmem:[%s1814 + $0x4] sm:$0xf]
        %v1817 = vld [vmem:[%s1814 + $0x8] sm:$0xf]
        %v1818 = vld [vmem:[%s1814 + $0xc] sm:$0xf]
        %v1819 = vld [vmem:[%s1814 + $0x10] sm:$0xf]
        %v1820 = vld [vmem:[%s1814 + $0x14] sm:$0xf]
        %v1821 = vld [vmem:[%s1814 + $0x18] sm:$0xf]
        %v1822 = vld [vmem:[%s1814 + $0x1c] sm:$0xf]
        %s1823 = scalar_lea.vmem %s12, 1
        %v1824 = vld [vmem:[%s1823] sm:$0x1]
        %v1826 = vperm.slane %v1824, 0
        %v1836 = vunpack.c.l.b16 %v1815
        %v1837 = vunpack.c.l.b16 %v1816
        %v1838 = vunpack.c.l.b16 %v1817
        %v1839 = vunpack.c.l.b16 %v1818
        %v1840 = vunpack.c.l.b16 %v1819
        %v1841 = vunpack.c.l.b16 %v1820
        %v1842 = vunpack.c.l.b16 %v1821
        %v1843 = vunpack.c.l.b16 %v1822
        %v1844 = vpack.c.b16 %v1837, %v1836
        %v1845 = vpack.c.b16 %v1839, %v1838
        %v1846 = vpack.c.b16 %v1841, %v1840
        %v1847 = vpack.c.b16 %v1843, %v1842
        %v1853 = vsel %vm651, %v1813, 0
        %1855 = vmatpush.bf16.msra.mxu0 0
        %1856 = vmatpush.bf16.msra.mxu0 0
        %1857 = vmatpush.bf16.msra.mxu0 0
        %1858 = vmatpush.bf16.msra.mxu0 0
        %1859 = vmatpush.bf16.msra.mxu0 %v1847
        %1860 = vmatpush.bf16.msra.mxu0 %v1846
        %1861 = vmatpush.bf16.msra.mxu0 %v1845
        %1862 = vmatpush.bf16.msra.mxu0 %v1844
        %1863 = vmatmul.bf16.gmra.mxu0 %v1853
        %v1864 = vpop.f32.mrf.mxu0
        %v1865 = vadd.f32 %v1826, %v1864
        %v1866 = vpop.f32.mrf.mxu0
        %1867 = vdwg.mxu0
        %v1868 = vmul.f32 %v1865, %v1865
        %v1869 = vmul.f32 %v1865, %v1868
        %v1870 = vmul.f32 %v1869, 0.044715
        %v1871 = vadd.f32 %v1865, %v1870
        %v1872 = vmul.f32 %v1871, 0.7978846
        %v1873 = vtanh.pop %v1872
        %v1874 = vadd.f32 %v1873, 1.0
        %v1875 = vmul.f32 %v1874, 0.5
        %v1876 = vmul.f32 %v1865, %v1875
        %v1877 = vpack.c.bf16 %v1876, %v1876
        %s1878 = scalar_lea.vmem %s13, 64
        %v1879 = vld [vmem:[%s1878] sm:$0xf]
        %v1880 = vld [vmem:[%s1878 + $0x4] sm:$0xf]
        %v1881 = vld [vmem:[%s1878 + $0x8] sm:$0xf]
        %v1882 = vld [vmem:[%s1878 + $0xc] sm:$0xf]
        %v1883 = vld [vmem:[%s1878 + $0x10] sm:$0xf]
        %v1884 = vld [vmem:[%s1878 + $0x14] sm:$0xf]
        %v1885 = vld [vmem:[%s1878 + $0x18] sm:$0xf]
        %v1886 = vld [vmem:[%s1878 + $0x1c] sm:$0xf]
        %v1887 = vld [vmem:[%s1878 + $0x20] sm:$0xf]
        %v1888 = vld [vmem:[%s1878 + $0x24] sm:$0xf]
        %v1889 = vld [vmem:[%s1878 + $0x28] sm:$0xf]
        %v1890 = vld [vmem:[%s1878 + $0x2c] sm:$0xf]
        %v1891 = vld [vmem:[%s1878 + $0x30] sm:$0xf]
        %v1892 = vld [vmem:[%s1878 + $0x34] sm:$0xf]
        %v1893 = vld [vmem:[%s1878 + $0x38] sm:$0xf]
        %v1894 = vld [vmem:[%s1878 + $0x3c] sm:$0xf]
        %s1895 = scalar_lea.vmem %s14, 1
        %v1896 = vld [vmem:[%s1895] sm:$0x1]
        %v1898 = vperm.slane %v1896, 0
        %v1916 = vunpack.c.l.b16 %v1879
        %v1917 = vunpack.c.l.b16 %v1880
        %v1918 = vunpack.c.l.b16 %v1881
        %v1919 = vunpack.c.l.b16 %v1882
        %v1920 = vunpack.c.l.b16 %v1883
        %v1921 = vunpack.c.l.b16 %v1884
        %v1922 = vunpack.c.l.b16 %v1885
        %v1923 = vunpack.c.l.b16 %v1886
        %v1924 = vunpack.c.l.b16 %v1887
        %v1925 = vunpack.c.l.b16 %v1888
        %v1926 = vunpack.c.l.b16 %v1889
        %v1927 = vunpack.c.l.b16 %v1890
        %v1928 = vunpack.c.l.b16 %v1891
        %v1929 = vunpack.c.l.b16 %v1892
        %v1930 = vunpack.c.l.b16 %v1893
        %v1931 = vunpack.c.l.b16 %v1894
        %v1932 = vpack.c.b16 %v1917, %v1916
        %v1933 = vpack.c.b16 %v1919, %v1918
        %v1934 = vpack.c.b16 %v1921, %v1920
        %v1935 = vpack.c.b16 %v1923, %v1922
        %v1936 = vpack.c.b16 %v1925, %v1924
        %v1937 = vpack.c.b16 %v1927, %v1926
        %v1938 = vpack.c.b16 %v1929, %v1928
        %v1939 = vpack.c.b16 %v1931, %v1930
        %1948 = vmatpush.bf16.msra.mxu0 %v1939
        %1949 = vmatpush.bf16.msra.mxu0 %v1938
        %1950 = vmatpush.bf16.msra.mxu0 %v1937
        %1951 = vmatpush.bf16.msra.mxu0 %v1936
        %1952 = vmatpush.bf16.msra.mxu0 %v1935
        %1953 = vmatpush.bf16.msra.mxu0 %v1934
        %1954 = vmatpush.bf16.msra.mxu0 %v1933
        %1955 = vmatpush.bf16.msra.mxu0 %v1932
        %1956 = vmatmul.bf16.gmra.mxu0 %v1877
        %v1957 = vpop.f32.mrf.mxu0
        %v1958 = vadd.f32 %v1898, %v1957
        %v1959 = vpop.f32.mrf.mxu0
        %1960 = vdwg.mxu0
        %v1961 = vadd.f32 %v1778, %v1958
        %v1962 = vld [vmem:[%s15] sm:$0x1]
        %v1963 = vld [vmem:[%s16] sm:$0x1]
        %v1964 = vsel %vm682, %v1961, 0.0
        %1965 = vadd.xlane.f32.xlu0 %v1964
        %v1966 = vpop.xlane.xlu0 %1965
        %v1967 = vmul.f32 %v1966, %v692
        %v1968 = vsub.f32 %v1961, %v1967
        %v1969 = vmul.f32 %v1968, %v1968
        %v1970 = vsel %vm682, %v1969, 0.0
        %1971 = vadd.xlane.f32.xlu0 %v1970
        %v1972 = vpop.xlane.xlu0 %1971
        %v1973 = vmul.f32 %v1972, %v692
        %v1974 = vadd.f32 %v1973, 1e-06
        %v1975 = vrsqrt.pop %v1974
        %v1976 = vmul.f32 %v1975, %v1974
        %v1977 = vmul.f32 %v1976, %v1975
        %v1978 = vmul.f32 0.5, %v1977
        %v1979 = vsub.f32 1.5, %v1978
        %v1980 = vmul.f32 %v1975, %v1979
        %vm1981 = vweird.f32 %v1974
        %vm1982 = vweird.f32 %v1975
        %vm1983 = vmor %vm1981, %vm1982
        %v1984 = vsel %vm1983, %v1975, %v1980
        %v1985 = vmul.f32 %v1968, %v1984
        %v1987 = vperm.slane %v1962, 0
        %v1989 = vmul.f32 %v1985, %v1987
        %v1991 = vperm.slane %v1963, 0
        %v1993 = vadd.f32 %v1989, %v1991
        %1994 = vst.msk [vmem:[%s541] sm:$0xf] %vm682, %v1993
        %s1995 = sand.u32 %s401, 1
        %s1996 = scalar_lea.sflag [#allocation3], %s1995
        %s1997 = sand.u32 %s401, 1
        %s1998 = smul.addr %s1997, 4
        %s1999 = scalar_lea.vmem [#allocation2], %s1998
        // Predicated region
        $region89: #{siglip_vision_transformer.1} parent=87 // pred_check
          %p2000 = pneg %p411
        $region90: #{siglip_vision_transformer.1} parent=87 // pred_check_branch
          %2002 = sbr.rel (%p2000) target = $region92
        $region91: #{siglip_vision_transformer.1} parent=87 // pred_region
          %2004 = vsyncadd %s1996, 0
          %s2005 = smul.addr %s31, 4
          %s2006 = scalar_lea.hbm %s17, %s2005
          %s2008 = sshll.u32 %s1999, 4
          %s2009 = int_to_ptr.vmem [resolvable:$true] %s2008
          %s2010 = sshll.u32 %s2006, 4
          %s2011 = int_to_ptr.hbm [resolvable:$true] %s2010
          %2013 = dma.vmem_to_hbm [thread:$0]  %s2009, 64, %s2011, %s1996
        $region92: #{siglip_vision_transformer.1} parent=87 // pred_fallthru
          _
      $region88: #{siglip_vision_transformer.1} parent=5 // pred_fallthru
        _
      %p2014 = scmp.le.s32.totalorder 2, %s26
      // Predicated region
      $region93: #{siglip_vision_transformer.1} parent=5 // pred_check
        %p2015 = pneg %p2014
      $region94: #{siglip_vision_transformer.1} parent=5 // pred_check_branch
        %2017 = sbr.rel (%p2015) target = $region96
      $region95: #{siglip_vision_transformer.1} parent=5 // pred_region
        %s2018 = ssub.s32 %s26, 2
        // Predicated region
        $region97: #{siglip_vision_transformer.1} parent=95 // pred_check
          %p2019 = pneg %p417
        $region98: #{siglip_vision_transformer.1} parent=95 // pred_check_branch
          %2021 = sbr.rel (%p2019) target = $region100
        $region99: #{siglip_vision_transformer.1} parent=95 // pred_region
          %s2022 = sand.u32 %s402, 1
          %s2023 = scalar_lea.sflag [#allocation3], %s2022
          %s2024 = sand.u32 %s402, 1
          %s2025 = smul.addr %s2024, 4
          %s2026 = scalar_lea.vmem [#allocation2], %s2025
          %2028 = dma.done %s2023, 64
        $region100: #{siglip_vision_transformer.1} parent=95 // pred_fallthru
          _
      $region96: #{siglip_vision_transformer.1} parent=5 // pred_fallthru
        _
    $region6: #{siglip_vision_transformer.1} parent=1 // loop_footer
      %s30 = sadd.s32 1, %s26
    $region7: #{siglip_vision_transformer.1} parent=1 // loop_footer_branch
      %25 = sbr.rel target = $region3
    $region8: #{siglip_vision_transformer.1} parent=1 // loop_exit
      _
    %2029 = vsyncpa [#allocation3], 1
    %s2030 = scalar_lea.sflag [#allocation3], 1
    %2031 = vsyncpa %s2030, 1

</llo_original>
